<compile_context>
chip_gen: v7x
topology: tpu7x:2x2x1
jax: 0.10.0
libtpu: 0.0.40
codegen_flags: <defaults>
</compile_context>

<pallas_src>
import math
import functools

import jax
import jax.numpy as jnp
from jax.experimental import pallas as pl
from jax.experimental.pallas import tpu as pltpu


# ---------------------------------------------------------------------------
# Generation-aware VMEM budget / tile targets.
# ---------------------------------------------------------------------------
def _vmem_capacity_bytes():
  try:
    info = pltpu.get_tpu_info()
    return int(getattr(info, "vmem_capacity_bytes", 128 * 1024 * 1024))
  except Exception:
    return 128 * 1024 * 1024


_VMEM_CAP = _vmem_capacity_bytes()
_SMALL_VMEM = _VMEM_CAP <= 64 * 1024 * 1024            # v7x: 64 MiB / TensorCore
_VMEM_LIMIT = min(_VMEM_CAP // 2, 64 * 1024 * 1024)    # 64 MiB v5e/v6e, 32 MiB v7x
_ROW_TILE = 256 if _SMALL_VMEM else 512                # flattened-batch row tiles
_SEQ_TILE = 128 if _SMALL_VMEM else 256                # T_q / T_c tiles
_LANE_TILE = 512                                       # Cout tiles (MXU N >= 256)


def _round_up(x, m):
  return ((x + m - 1) // m) * m


def _pick_tile(total, target):
  """Largest power-of-two fraction of `target` (>=8) dividing `total`, else full."""
  if total <= target:
    return total
  t = target
  while t >= 8:
    if total % t == 0:
      return t
    t //= 2
  return total


def _lane_tile(total, target):
  if total <= target:
    return total
  t = target
  while t >= 128:
    if total % t == 0:
      return t
    t //= 2
  return total


def _row_tile(rows, target):
  """(block_rows, padded_rows): multiple-of-8 row block, >=2 blocks when possible."""
  bm = min(target, _round_up(rows, 8))
  if bm >= rows and rows > 8:      # would be a single block -> split for megacore
    bm = _round_up(max(8, _round_up(rows, 8) // 2), 8)
  rows_pad = _round_up(rows, bm)
  return bm, rows_pad


def _resident_spec(block_shape, index_map):
  """Constant-index (VMEM-resident) operand; single-buffer it when supported."""
  try:
    return pl.BlockSpec(block_shape, index_map, pipeline_mode=pl.Buffered(1))
  except Exception:
    return pl.BlockSpec(block_shape, index_map)


# ---------------------------------------------------------------------------
# Projection kernel with head split done by the output BlockSpec index map.
#   x: (B, T, C_in) @ w: (G, C_in, D) + b: (G, 1, D) -> (B, G, T, D)
# ---------------------------------------------------------------------------
def _proj_heads_kernel(x_ref, w_ref, b_ref, o_ref):
  acc = jnp.dot(x_ref[0], w_ref[0], preferred_element_type=jnp.float32)
  o_ref[0, 0] = (acc + b_ref[0]).astype(o_ref.dtype)


def _proj_heads(x, w, b):
  B, T, C_in = x.shape
  G, _, D = w.shape
  tt = _pick_tile(T, _SEQ_TILE)
  n_t = T // tt
  return pl.pallas_call(
      _proj_heads_kernel,
      out_shape=jax.ShapeDtypeStruct((B, G, T, D), jnp.bfloat16),
      grid_spec=pltpu.PrefetchScalarGridSpec(
          num_scalar_prefetch=0,
          grid=(B, G, n_t),
          in_specs=[
              pl.BlockSpec((1, tt, C_in), lambda b, g, t: (b, t, 0)),
              pl.BlockSpec((1, C_in, D), lambda b, g, t: (g, 0, 0)),
              pl.BlockSpec((1, 1, D), lambda b, g, t: (g, 0, 0)),
          ],
          out_specs=pl.BlockSpec((1, 1, tt, D), lambda b, g, t: (b, g, t, 0)),
      ),
      compiler_params=pltpu.CompilerParams(
          dimension_semantics=("parallel", "parallel", "parallel"),
          vmem_limit_bytes=_VMEM_LIMIT),
  )(x.astype(jnp.bfloat16), w, b)


# ---------------------------------------------------------------------------
# Flash-style attention: online softmax over T_c tiles, all heads fused.
# ---------------------------------------------------------------------------
def _flash_kernel(q_ref, k_ref, v_ref, o_ref, m_sc, l_sc, acc_sc):
  kv_i = pl.program_id(2)

  @pl.when(kv_i == 0)
  def _init():
    m_sc[...] = jnp.full(m_sc.shape, -jnp.inf, m_sc.dtype)
    l_sc[...] = jnp.zeros(l_sc.shape, l_sc.dtype)
    acc_sc[...] = jnp.zeros(acc_sc.shape, acc_sc.dtype)

  q = q_ref[0]   # (H, tq, D) bf16 -- already scaled by 1/sqrt(D) (folded into wq)
  k = k_ref[0]   # (H, tkv, D) bf16
  v = v_ref[0]   # (H, tkv, D) bf16

  # QK^T batched over heads, contracting over D.
  s = jax.lax.dot_general(
      q, k, dimension_numbers=(((2,), (2,)), ((0,), (0,))),
      preferred_element_type=jnp.float32)            # (H, tq, tkv) f32

  m_prev = m_sc[...]
  m_new = jnp.maximum(m_prev, jnp.max(s, axis=-1, keepdims=True))
  alpha = jnp.exp(m_prev - m_new)                    # (H, tq, 1)
  p = jnp.exp(s - m_new)                             # unnormalized probabilities

  l_sc[...] = alpha * l_sc[...] + jnp.sum(p, axis=-1, keepdims=True)
  acc_sc[...] = alpha * acc_sc[...] + jax.lax.dot_general(
      p.astype(v.dtype), v, dimension_numbers=(((2,), (1,)), ((0,), (0,))),
      preferred_element_type=jnp.float32)            # (H, tq, D) f32
  m_sc[...] = m_new

  @pl.when(kv_i == pl.num_programs(2) - 1)
  def _finalize():
    # Deferred normalization: scale the PV accumulator (H*tq*D) instead of the
    # probabilities (H*tq*tkv); divide goes to the EUP (approx reciprocal).
    o_ref[0] = (acc_sc[...] * pl.reciprocal(l_sc[...], approx=True)
                ).astype(o_ref.dtype)


def _flash_attention(q4, kv4):
  """q4: (B, H, T_q, D); kv4: (B, 2H, T_c, D) with k heads first, then v heads."""
  B, H, T_q, D = q4.shape
  T_c = kv4.shape[2]
  tq = _pick_tile(T_q, _SEQ_TILE)
  tkv = _pick_tile(T_c, _SEQ_TILE)
  grid = (B, T_q // tq, T_c // tkv)

  q_spec = pl.BlockSpec((1, H, tq, D), lambda b, qi, ki: (b, 0, qi, 0))
  k_spec = pl.BlockSpec((1, H, tkv, D), lambda b, qi, ki: (b, 0, ki, 0))
  v_spec = pl.BlockSpec((1, H, tkv, D), lambda b, qi, ki: (b, 1, ki, 0))
  o_spec = pl.BlockSpec((1, H, tq, D), lambda b, qi, ki: (b, 0, qi, 0))

  return pl.pallas_call(
      _flash_kernel,
      out_shape=jax.ShapeDtypeStruct((B, H, T_q, D), jnp.bfloat16),
      grid_spec=pltpu.PrefetchScalarGridSpec(
          num_scalar_prefetch=0,
          grid=grid,
          in_specs=[q_spec, k_spec, v_spec],
          out_specs=o_spec,
          scratch_shapes=[
              pltpu.VMEM((H, tq, 1), jnp.float32),   # running max
              pltpu.VMEM((H, tq, 1), jnp.float32),   # running denominator
              pltpu.VMEM((H, tq, D), jnp.float32),   # running PV accumulator
          ]),
      compiler_params=pltpu.CompilerParams(
          dimension_semantics=("parallel", "parallel", "arbitrary"),
          vmem_limit_bytes=_VMEM_LIMIT),
  )(q4, kv4, kv4)   # same fused kv tensor read twice: k block (0) / v block (1)


# ---------------------------------------------------------------------------
# Output projection: padded row tiles, Cout-tiled, resident weights.
# ---------------------------------------------------------------------------
def _linear_kernel(x_ref, w_ref, b_ref, o_ref):
  acc = jnp.dot(x_ref[...], w_ref[...], preferred_element_type=jnp.float32)
  o_ref[...] = (acc + b_ref[...]).astype(o_ref.dtype)


def _linear_pallas(x2d, w, b, *, out_dtype):
  """x2d: (R, Cin) @ w: (Cin, Cout) + b: (1, Cout) -> (R, Cout)."""
  R, Cin = x2d.shape
  Cout = w.shape[1]
  bn = _lane_tile(Cout, _LANE_TILE)
  nj = Cout // bn
  bm, r_pad = _row_tile(R, _ROW_TILE)
  if r_pad != R:
    x2d = jnp.pad(x2d, ((0, r_pad - R), (0, 0)))
  ni = r_pad // bm

  w_map = lambda j, i: (0, j)
  b_map = lambda j, i: (0, j)
  if nj == 1:   # truly constant index maps -> VMEM-resident, single-buffered
    w_spec, b_spec = _resident_spec((Cin, bn), w_map), _resident_spec((1, bn), b_map)
  else:
    w_spec, b_spec = pl.BlockSpec((Cin, bn), w_map), pl.BlockSpec((1, bn), b_map)

  out = pl.pallas_call(
      _linear_kernel,
      out_shape=jax.ShapeDtypeStruct((r_pad, Cout), out_dtype),
      grid_spec=pltpu.PrefetchScalarGridSpec(
          num_scalar_prefetch=0,
          grid=(nj, ni),
          in_specs=[pl.BlockSpec((bm, Cin), lambda j, i: (i, 0)), w_spec, b_spec],
          out_specs=pl.BlockSpec((bm, bn), lambda j, i: (i, j)),
      ),
      compiler_params=pltpu.CompilerParams(
          dimension_semantics=("parallel", "parallel"),
          vmem_limit_bytes=_VMEM_LIMIT),
  )(x2d, w, b)
  return out[:R] if r_pad != R else out


# ---------------------------------------------------------------------------
# Parameter prep (one-time) + full forward.
# ---------------------------------------------------------------------------
def prepare_params(params, *, n_heads):
  """Fold 1/sqrt(D) into wq/bq, split weights per head, pre-fuse k/v weights."""
  wq, bq, wk, bk, wv, bv, wo, bo = params
  h_dim = wq.shape[1]
  assert h_dim % n_heads == 0, "Invalid numbers of heads"
  D = h_dim // n_heads
  scale = 1.0 / math.sqrt(D)

  def per_head(w, b):
    c_in = w.shape[0]
    wh = w.reshape(c_in, n_heads, D).transpose(1, 0, 2)   # (H, C_in, D)
    bh = b.reshape(1, n_heads, D).transpose(1, 0, 2)      # (H, 1, D)
    return wh, bh

  wq_h, bq_h = per_head(wq * scale, bq * scale)
  wk_h, bk_h = per_head(wk, bk)
  wv_h, bv_h = per_head(wv, bv)
  return dict(
      wq=wq_h.astype(jnp.bfloat16), bq=bq_h.astype(jnp.float32),
      wkv=jnp.concatenate([wk_h, wv_h], 0).astype(jnp.bfloat16),
      bkv=jnp.concatenate([bk_h, bv_h], 0).astype(jnp.float32),
      wo=wo.astype(jnp.bfloat16), bo=bo.astype(jnp.float32))


def cross_attention_pallas(query, context, prep, *, n_heads):
  """query: (B, T_q, C_q), context: (B, T_c, C_c) -> (B, T_q, out_dim)."""
  B, T_q, _ = query.shape
  H = n_heads
  D = prep["wq"].shape[2]
  h_dim = H * D
  out_dim = prep["wo"].shape[1]

  q4 = _proj_heads(query, prep["wq"], prep["bq"])        # (B, H,  T_q, D)
  kv4 = _proj_heads(context, prep["wkv"], prep["bkv"])   # (B, 2H, T_c, D)

  att4 = _flash_attention(q4, kv4)                       # (B, H, T_q, D) bf16

  # TODO(synk): fuse this head-merge + output projection into the attention
  # epilogue (lane-dense (T_q, H*D) store) to skip this HBM round trip.
  att2d = att4.transpose(0, 2, 1, 3).reshape(B * T_q, h_dim)

  out = _linear_pallas(att2d, prep["wo"], prep["bo"], out_dtype=query.dtype)
  return out.reshape(B, T_q, out_dim)


# ---------------------------------------------------------------------------
# Reference + test harness.
# ---------------------------------------------------------------------------
def _init_linear(key, in_dim, out_dim):
  kw, kb = jax.random.split(key)
  bound = 1.0 / math.sqrt(in_dim)
  w = jax.random.uniform(kw, (in_dim, out_dim), jnp.float32, -bound, bound)
  b = jax.random.uniform(kb, (1, out_dim), jnp.float32, -bound, bound)
  return w, b


def reference_cross_attention(query, context, params, *, n_heads):
  wq, bq, wk, bk, wv, bv, wo, bo = params
  B, T_q, _ = query.shape
  _, T_c, _ = context.shape
  h_dim = wq.shape[1]
  D = h_dim // n_heads
  q = (query @ wq + bq).reshape(B, T_q, n_heads, D).transpose(0, 2, 1, 3)
  k = (context @ wk + bk).reshape(B, T_c, n_heads, D).transpose(0, 2, 1, 3)
  v = (context @ wv + bv).reshape(B, T_c, n_heads, D).transpose(0, 2, 1, 3)
  w = jnp.einsum("bhqd,bhkd->bhqk", q, k) / math.sqrt(D)
  p = jax.nn.softmax(w, axis=-1)
  att = jnp.einsum("bhqk,bhkd->bhqd", p, v)
  att = att.transpose(0, 2, 1, 3).reshape(B, T_q, h_dim)
  return att @ wo + bo


if __name__ == "__main__":
  B, T_q, T_c = 2, 8, 8
  query_dim, context_dim = 16, 16
  h_dim, out_dim, n_heads = 32, 16, 4
  # drop_p is irrelevant in eval mode (dropout == identity).

  key = jax.random.PRNGKey(0)
  kq, kc, k1, k2, k3, k4 = jax.random.split(key, 6)

  query = jax.random.normal(kq, (B, T_q, query_dim), jnp.float32)
  context = jax.random.normal(kc, (B, T_c, context_dim), jnp.float32)

  wq, bq = _init_linear(k1, query_dim, h_dim)
  wk, bk = _init_linear(k2, context_dim, h_dim)
  wv, bv = _init_linear(k3, context_dim, h_dim)
  wo, bo = _init_linear(k4, h_dim, out_dim)
  params = (wq, bq, wk, bk, wv, bv, wo, bo)

  prep = prepare_params(params, n_heads=n_heads)   # one-time weight prep/fusion

  fn = jax.jit(functools.partial(cross_attention_pallas, n_heads=n_heads))
  out = fn(query, context, prep)
  out = jax.block_until_ready(out)

  ref = reference_cross_attention(query, context, params, n_heads=n_heads)
  assert out.shape == (B, T_q, out_dim)
  # bf16 MXU operands (f32 accumulation) vs the f32 reference -> loose-ish tol.
  assert jnp.allclose(out, ref, atol=3e-2, rtol=3e-2), "mismatch vs reference"

  print("KERNEL_OK")
</pallas_src>

<mosaic_0001>
module attributes {stable_mosaic.version = 11 : i64} {
  func.func @_proj_heads_kernel(%arg0: i32, %arg1: i32, %arg2: i32, %arg3: memref<1x8x16xbf16, #tpu.memory_space<vmem>>, %arg4: memref<1x16x8xbf16, #tpu.memory_space<vmem>>, %arg5: memref<1x1x8xf32, #tpu.memory_space<vmem>>, %arg6: memref<1x1x8x8xbf16, #tpu.memory_space<vmem>>) attributes {dimension_semantics = [#tpu.dimension_semantics<parallel>, #tpu.dimension_semantics<parallel>, #tpu.dimension_semantics<parallel>], iteration_bounds = array<i64: 2, 4, 1>, scalar_prefetch = 0 : i64, scratch_operands = 0 : i64, tpu.core_type = #tpu.core_type<tc>, window_params = [{transform_indices = @transform_0, window_bounds = array<i64: 1, 8, 16>}, {transform_indices = @transform_1, window_bounds = array<i64: 1, 16, 8>}, {transform_indices = @transform_2, window_bounds = array<i64: 1, 1, 8>}, {transform_indices = @transform_3, window_bounds = array<i64: 1, 1, 8, 8>}]} {
    %c0 = arith.constant 0 : index
    %c0_0 = arith.constant 0 : index
    %c0_1 = arith.constant 0 : index
    %0 = vector.load %arg3[%c0, %c0_0, %c0_1] : memref<1x8x16xbf16, #tpu.memory_space<vmem>>, vector<1x8x16xbf16>
    %1 = vector.shape_cast %0 : vector<1x8x16xbf16> to vector<8x16xbf16>
    %c0_2 = arith.constant 0 : index
    %c0_3 = arith.constant 0 : index
    %c0_4 = arith.constant 0 : index
    %2 = vector.load %arg4[%c0_2, %c0_3, %c0_4] : memref<1x16x8xbf16, #tpu.memory_space<vmem>>, vector<1x16x8xbf16>
    %3 = vector.shape_cast %2 : vector<1x16x8xbf16> to vector<16x8xbf16>
    %cst = arith.constant dense<0.000000e+00> : vector<8x8xf32>
    %4 = tpu.matmul %1, %3, %cst {dimension_numbers = #tpu.dot_dimension_numbers<[1], [0], [0], [1], [0, 0, 1, 1], [], []>} : vector<8x16xbf16>, vector<16x8xbf16>, vector<8x8xf32> -> vector<8x8xf32>
    %c0_5 = arith.constant 0 : index
    %c0_6 = arith.constant 0 : index
    %c0_7 = arith.constant 0 : index
    %5 = vector.load %arg5[%c0_5, %c0_6, %c0_7] : memref<1x1x8xf32, #tpu.memory_space<vmem>>, vector<1x1x8xf32>
    %6 = vector.shape_cast %5 : vector<1x1x8xf32> to vector<1x8xf32>
    %7 = vector.broadcast %6 : vector<1x8xf32> to vector<8x8xf32>
    %8 = arith.addf %4, %7 : vector<8x8xf32>
    %9 = arith.truncf %8 : vector<8x8xf32> to vector<8x8xbf16>
    %c0_8 = arith.constant 0 : index
    %c0_9 = arith.constant 0 : index
    %c0_10 = arith.constant 0 : index
    %c0_11 = arith.constant 0 : index
    %10 = vector.load %arg6[%c0_8, %c0_9, %c0_10, %c0_11] : memref<1x1x8x8xbf16, #tpu.memory_space<vmem>>, vector<1x1x8x8xbf16>
    %11 = vector.shape_cast %10 : vector<1x1x8x8xbf16> to vector<8x8xbf16>
    %12 = vector.shape_cast %9 : vector<8x8xbf16> to vector<1x1x8x8xbf16>
    tpu.vector_store %arg6[%c0_8, %c0_9, %c0_10, %c0_11], %12 {strides = array<i32>} : memref<1x1x8x8xbf16, #tpu.memory_space<vmem>>, vector<1x1x8x8xbf16>,
    return
  }
  func.func @transform_0(%arg0: i32, %arg1: i32, %arg2: i32) -> (i32, i32, i32) {
    %c0_i32 = arith.constant 0 : i32
    %c0_i32_0 = arith.constant 0 : i32
    return %arg0, %arg2, %c0_i32 : i32, i32, i32
  }
  func.func @transform_1(%arg0: i32, %arg1: i32, %arg2: i32) -> (i32, i32, i32) {
    %c0_i32 = arith.constant 0 : i32
    %c0_i32_0 = arith.constant 0 : i32
    %c0_i32_1 = arith.constant 0 : i32
    return %arg1, %c0_i32, %c0_i32_0 : i32, i32, i32
  }
  func.func @transform_2(%arg0: i32, %arg1: i32, %arg2: i32) -> (i32, i32, i32) {
    %c0_i32 = arith.constant 0 : i32
    %c0_i32_0 = arith.constant 0 : i32
    %c0_i32_1 = arith.constant 0 : i32
    return %arg1, %c0_i32, %c0_i32_0 : i32, i32, i32
  }
  func.func @transform_3(%arg0: i32, %arg1: i32, %arg2: i32) -> (i32, i32, i32, i32) {
    %c0_i32 = arith.constant 0 : i32
    %c0_i32_0 = arith.constant 0 : i32
    return %arg0, %arg1, %arg2, %c0_i32 : i32, i32, i32, i32
  }
}

module attributes {stable_mosaic.version = 11 : i64} {
  func.func @_proj_heads_kernel(%arg0: i32, %arg1: i32, %arg2: i32, %arg3: memref<1x8x16xbf16, #tpu.memory_space<vmem>>, %arg4: memref<1x16x8xbf16, #tpu.memory_space<vmem>>, %arg5: memref<1x1x8xf32, #tpu.memory_space<vmem>>, %arg6: memref<1x1x8x8xbf16, #tpu.memory_space<vmem>>) attributes {dimension_semantics = [#tpu.dimension_semantics<parallel>, #tpu.dimension_semantics<parallel>, #tpu.dimension_semantics<parallel>], iteration_bounds = array<i64: 2, 8, 1>, scalar_prefetch = 0 : i64, scratch_operands = 0 : i64, tpu.core_type = #tpu.core_type<tc>, window_params = [{transform_indices = @transform_0, window_bounds = array<i64: 1, 8, 16>}, {transform_indices = @transform_1, window_bounds = array<i64: 1, 16, 8>}, {transform_indices = @transform_2, window_bounds = array<i64: 1, 1, 8>}, {transform_indices = @transform_3, window_bounds = array<i64: 1, 1, 8, 8>}]} {
    %c0 = arith.constant 0 : index
    %c0_0 = arith.constant 0 : index
    %c0_1 = arith.constant 0 : index
    %0 = vector.load %arg3[%c0, %c0_0, %c0_1] : memref<1x8x16xbf16, #tpu.memory_space<vmem>>, vector<1x8x16xbf16>
    %1 = vector.shape_cast %0 : vector<1x8x16xbf16> to vector<8x16xbf16>
    %c0_2 = arith.constant 0 : index
    %c0_3 = arith.constant 0 : index
    %c0_4 = arith.constant 0 : index
    %2 = vector.load %arg4[%c0_2, %c0_3, %c0_4] : memref<1x16x8xbf16, #tpu.memory_space<vmem>>, vector<1x16x8xbf16>
    %3 = vector.shape_cast %2 : vector<1x16x8xbf16> to vector<16x8xbf16>
    %cst = arith.constant dense<0.000000e+00> : vector<8x8xf32>
    %4 = tpu.matmul %1, %3, %cst {dimension_numbers = #tpu.dot_dimension_numbers<[1], [0], [0], [1], [0, 0, 1, 1], [], []>} : vector<8x16xbf16>, vector<16x8xbf16>, vector<8x8xf32> -> vector<8x8xf32>
    %c0_5 = arith.constant 0 : index
    %c0_6 = arith.constant 0 : index
    %c0_7 = arith.constant 0 : index
    %5 = vector.load %arg5[%c0_5, %c0_6, %c0_7] : memref<1x1x8xf32, #tpu.memory_space<vmem>>, vector<1x1x8xf32>
    %6 = vector.shape_cast %5 : vector<1x1x8xf32> to vector<1x8xf32>
    %7 = vector.broadcast %6 : vector<1x8xf32> to vector<8x8xf32>
    %8 = arith.addf %4, %7 : vector<8x8xf32>
    %9 = arith.truncf %8 : vector<8x8xf32> to vector<8x8xbf16>
    %c0_8 = arith.constant 0 : index
    %c0_9 = arith.constant 0 : index
    %c0_10 = arith.constant 0 : index
    %c0_11 = arith.constant 0 : index
    %10 = vector.load %arg6[%c0_8, %c0_9, %c0_10, %c0_11] : memref<1x1x8x8xbf16, #tpu.memory_space<vmem>>, vector<1x1x8x8xbf16>
    %11 = vector.shape_cast %10 : vector<1x1x8x8xbf16> to vector<8x8xbf16>
    %12 = vector.shape_cast %9 : vector<8x8xbf16> to vector<1x1x8x8xbf16>
    tpu.vector_store %arg6[%c0_8, %c0_9, %c0_10, %c0_11], %12 {strides = array<i32>} : memref<1x1x8x8xbf16, #tpu.memory_space<vmem>>, vector<1x1x8x8xbf16>,
    return
  }
  func.func @transform_0(%arg0: i32, %arg1: i32, %arg2: i32) -> (i32, i32, i32) {
    %c0_i32 = arith.constant 0 : i32
    %c0_i32_0 = arith.constant 0 : i32
    return %arg0, %arg2, %c0_i32 : i32, i32, i32
  }
  func.func @transform_1(%arg0: i32, %arg1: i32, %arg2: i32) -> (i32, i32, i32) {
    %c0_i32 = arith.constant 0 : i32
    %c0_i32_0 = arith.constant 0 : i32
    %c0_i32_1 = arith.constant 0 : i32
    return %arg1, %c0_i32, %c0_i32_0 : i32, i32, i32
  }
  func.func @transform_2(%arg0: i32, %arg1: i32, %arg2: i32) -> (i32, i32, i32) {
    %c0_i32 = arith.constant 0 : i32
    %c0_i32_0 = arith.constant 0 : i32
    %c0_i32_1 = arith.constant 0 : i32
    return %arg1, %c0_i32, %c0_i32_0 : i32, i32, i32
  }
  func.func @transform_3(%arg0: i32, %arg1: i32, %arg2: i32) -> (i32, i32, i32, i32) {
    %c0_i32 = arith.constant 0 : i32
    %c0_i32_0 = arith.constant 0 : i32
    return %arg0, %arg1, %arg2, %c0_i32 : i32, i32, i32, i32
  }
}

module attributes {stable_mosaic.version = 11 : i64} {
  func.func @_flash_kernel(%arg0: i32, %arg1: i32, %arg2: i32, %arg3: memref<1x4x8x8xbf16, #tpu.memory_space<vmem>>, %arg4: memref<1x4x8x8xbf16, #tpu.memory_space<vmem>>, %arg5: memref<1x4x8x8xbf16, #tpu.memory_space<vmem>>, %arg6: memref<1x4x8x8xbf16, #tpu.memory_space<vmem>>, %arg7: memref<4x8x1xf32, #tpu.memory_space<vmem>>, %arg8: memref<4x8x1xf32, #tpu.memory_space<vmem>>, %arg9: memref<4x8x8xf32, #tpu.memory_space<vmem>>) attributes {dimension_semantics = [#tpu.dimension_semantics<parallel>, #tpu.dimension_semantics<parallel>, #tpu.dimension_semantics<arbitrary>], iteration_bounds = array<i64: 2, 1, 1>, scalar_prefetch = 0 : i64, scratch_operands = 3 : i64, tpu.core_type = #tpu.core_type<tc>, window_params = [{transform_indices = @transform_0, window_bounds = array<i64: 1, 4, 8, 8>}, {transform_indices = @transform_1, window_bounds = array<i64: 1, 4, 8, 8>}, {transform_indices = @transform_2, window_bounds = array<i64: 1, 4, 8, 8>}, {transform_indices = @transform_3, window_bounds = array<i64: 1, 4, 8, 8>}]} {
    %c0_i32 = arith.constant 0 : i32
    %0 = arith.cmpi eq, %arg2, %c0_i32 : i32
    %1 = arith.extui %0 : i1 to i32
    %c0_i32_0 = arith.constant 0 : i32
    %2 = arith.cmpi ne, %1, %c0_i32_0 : i32
    scf.if %2 {
      %cst_35 = arith.constant 0xFF800000 : f32
      %36 = vector.broadcast %cst_35 : f32 to vector<4x8x1xf32>
      %c0_36 = arith.constant 0 : index
      %c0_37 = arith.constant 0 : index
      %c0_38 = arith.constant 0 : index
      %37 = vector.load %arg7[%c0_36, %c0_37, %c0_38] : memref<4x8x1xf32, #tpu.memory_space<vmem>>, vector<4x8x1xf32>
      tpu.vector_store %arg7[%c0_36, %c0_37, %c0_38], %36 {strides = array<i32>} : memref<4x8x1xf32, #tpu.memory_space<vmem>>, vector<4x8x1xf32>,
      %cst_39 = arith.constant 0.000000e+00 : f32
      %38 = vector.broadcast %cst_39 : f32 to vector<4x8x1xf32>
      %c0_40 = arith.constant 0 : index
      %c0_41 = arith.constant 0 : index
      %c0_42 = arith.constant 0 : index
      %39 = vector.load %arg8[%c0_40, %c0_41, %c0_42] : memref<4x8x1xf32, #tpu.memory_space<vmem>>, vector<4x8x1xf32>
      tpu.vector_store %arg8[%c0_40, %c0_41, %c0_42], %38 {strides = array<i32>} : memref<4x8x1xf32, #tpu.memory_space<vmem>>, vector<4x8x1xf32>,
      %cst_43 = arith.constant 0.000000e+00 : f32
      %40 = vector.broadcast %cst_43 : f32 to vector<4x8x8xf32>
      %c0_44 = arith.constant 0 : index
      %c0_45 = arith.constant 0 : index
      %c0_46 = arith.constant 0 : index
      %41 = vector.load %arg9[%c0_44, %c0_45, %c0_46] : memref<4x8x8xf32, #tpu.memory_space<vmem>>, vector<4x8x8xf32>
      tpu.vector_store %arg9[%c0_44, %c0_45, %c0_46], %40 {strides = array<i32>} : memref<4x8x8xf32, #tpu.memory_space<vmem>>, vector<4x8x8xf32>,
    } else {
    }
    %c0 = arith.constant 0 : index
    %c0_1 = arith.constant 0 : index
    %c0_2 = arith.constant 0 : index
    %c0_3 = arith.constant 0 : index
    %3 = vector.load %arg3[%c0, %c0_1, %c0_2, %c0_3] : memref<1x4x8x8xbf16, #tpu.memory_space<vmem>>, vector<1x4x8x8xbf16>
    %4 = vector.shape_cast %3 : vector<1x4x8x8xbf16> to vector<4x8x8xbf16>
    %c0_4 = arith.constant 0 : index
    %c0_5 = arith.constant 0 : index
    %c0_6 = arith.constant 0 : index
    %c0_7 = arith.constant 0 : index
    %5 = vector.load %arg4[%c0_4, %c0_5, %c0_6, %c0_7] : memref<1x4x8x8xbf16, #tpu.memory_space<vmem>>, vector<1x4x8x8xbf16>
    %6 = vector.shape_cast %5 : vector<1x4x8x8xbf16> to vector<4x8x8xbf16>
    %c0_8 = arith.constant 0 : index
    %c0_9 = arith.constant 0 : index
    %c0_10 = arith.constant 0 : index
    %c0_11 = arith.constant 0 : index
    %7 = vector.load %arg5[%c0_8, %c0_9, %c0_10, %c0_11] : memref<1x4x8x8xbf16, #tpu.memory_space<vmem>>, vector<1x4x8x8xbf16>
    %8 = vector.shape_cast %7 : vector<1x4x8x8xbf16> to vector<4x8x8xbf16>
    %cst = arith.constant dense<0.000000e+00> : vector<4x8x8xf32>
    %9 = tpu.matmul %4, %6, %cst {dimension_numbers = #tpu.dot_dimension_numbers<[2], [2], [1], [1], [0, 0, 0, 1, 1, 1], [0], [0]>} : vector<4x8x8xbf16>, vector<4x8x8xbf16>, vector<4x8x8xf32> -> vector<4x8x8xf32>
    %c0_12 = arith.constant 0 : index
    %c0_13 = arith.constant 0 : index
    %c0_14 = arith.constant 0 : index
    %10 = vector.load %arg7[%c0_12, %c0_13, %c0_14] : memref<4x8x1xf32, #tpu.memory_space<vmem>>, vector<4x8x1xf32>
    %cst_15 = arith.constant dense<0xFF800000> : vector<4x8xf32>
    %11 = vector.multi_reduction <maximumf>, %9, %cst_15 [2] : vector<4x8x8xf32> to vector<4x8xf32>
    %12 = vector.shape_cast %11 : vector<4x8xf32> to vector<4x8x1xf32>
    %13 = arith.maximumf %10, %12 : vector<4x8x1xf32>
    %14 = arith.subf %10, %13 : vector<4x8x1xf32>
    %15 = math.exp %14 : vector<4x8x1xf32>
    %16 = vector.broadcast %13 : vector<4x8x1xf32> to vector<4x8x8xf32>
    %17 = arith.subf %9, %16 : vector<4x8x8xf32>
    %18 = math.exp %17 : vector<4x8x8xf32>
    %c0_16 = arith.constant 0 : index
    %c0_17 = arith.constant 0 : index
    %c0_18 = arith.constant 0 : index
    %19 = vector.load %arg8[%c0_16, %c0_17, %c0_18] : memref<4x8x1xf32, #tpu.memory_space<vmem>>, vector<4x8x1xf32>
    %20 = arith.mulf %15, %19 : vector<4x8x1xf32>
    %cst_19 = arith.constant dense<0.000000e+00> : vector<4x8xf32>
    %21 = vector.multi_reduction <add>, %18, %cst_19 [2] : vector<4x8x8xf32> to vector<4x8xf32>
    %22 = vector.shape_cast %21 : vector<4x8xf32> to vector<4x8x1xf32>
    %23 = arith.addf %20, %22 : vector<4x8x1xf32>
    %c0_20 = arith.constant 0 : index
    %c0_21 = arith.constant 0 : index
    %c0_22 = arith.constant 0 : index
    %24 = vector.load %arg8[%c0_20, %c0_21, %c0_22] : memref<4x8x1xf32, #tpu.memory_space<vmem>>, vector<4x8x1xf32>
    tpu.vector_store %arg8[%c0_20, %c0_21, %c0_22], %23 {strides = array<i32>} : memref<4x8x1xf32, #tpu.memory_space<vmem>>, vector<4x8x1xf32>,
    %c0_23 = arith.constant 0 : index
    %c0_24 = arith.constant 0 : index
    %c0_25 = arith.constant 0 : index
    %25 = vector.load %arg9[%c0_23, %c0_24, %c0_25] : memref<4x8x8xf32, #tpu.memory_space<vmem>>, vector<4x8x8xf32>
    %26 = vector.broadcast %15 : vector<4x8x1xf32> to vector<4x8x8xf32>
    %27 = arith.mulf %26, %25 : vector<4x8x8xf32>
    %28 = arith.truncf %18 : vector<4x8x8xf32> to vector<4x8x8xbf16>
    %cst_26 = arith.constant dense<0.000000e+00> : vector<4x8x8xf32>
    %29 = tpu.matmul %28, %8, %cst_26 {dimension_numbers = #tpu.dot_dimension_numbers<[2], [1], [1], [2], [0, 0, 0, 1, 1, 2], [0], [0]>} : vector<4x8x8xbf16>, vector<4x8x8xbf16>, vector<4x8x8xf32> -> vector<4x8x8xf32>
    %30 = arith.addf %27, %29 : vector<4x8x8xf32>
    %c0_27 = arith.constant 0 : index
    %c0_28 = arith.constant 0 : index
    %c0_29 = arith.constant 0 : index
    %31 = vector.load %arg9[%c0_27, %c0_28, %c0_29] : memref<4x8x8xf32, #tpu.memory_space<vmem>>, vector<4x8x8xf32>
    tpu.vector_store %arg9[%c0_27, %c0_28, %c0_29], %30 {strides = array<i32>} : memref<4x8x8xf32, #tpu.memory_space<vmem>>, vector<4x8x8xf32>,
    %c0_30 = arith.constant 0 : index
    %c0_31 = arith.constant 0 : index
    %c0_32 = arith.constant 0 : index
    %32 = vector.load %arg7[%c0_30, %c0_31, %c0_32] : memref<4x8x1xf32, #tpu.memory_space<vmem>>, vector<4x8x1xf32>
    tpu.vector_store %arg7[%c0_30, %c0_31, %c0_32], %13 {strides = array<i32>} : memref<4x8x1xf32, #tpu.memory_space<vmem>>, vector<4x8x1xf32>,
    %c0_i32_33 = arith.constant 0 : i32
    %33 = arith.cmpi eq, %arg2, %c0_i32_33 : i32
    %34 = arith.extui %33 : i1 to i32
    %c0_i32_34 = arith.constant 0 : i32
    %35 = arith.cmpi ne, %34, %c0_i32_34 : i32
    scf.if %35 {
      %c0_35 = arith.constant 0 : index
      %c0_36 = arith.constant 0 : index
      %c0_37 = arith.constant 0 : index
      %36 = vector.load %arg9[%c0_35, %c0_36, %c0_37] : memref<4x8x8xf32, #tpu.memory_space<vmem>>, vector<4x8x8xf32>
      %c0_38 = arith.constant 0 : index
      %c0_39 = arith.constant 0 : index
      %c0_40 = arith.constant 0 : index
      %37 = vector.load %arg8[%c0_38, %c0_39, %c0_40] : memref<4x8x1xf32, #tpu.memory_space<vmem>>, vector<4x8x1xf32>
      %38 = tpu.reciprocal %37 {approx = true} : vector<4x8x1xf32> -> vector<4x8x1xf32>
      %39 = vector.broadcast %38 : vector<4x8x1xf32> to vector<4x8x8xf32>
      %40 = arith.mulf %36, %39 : vector<4x8x8xf32>
      %41 = arith.truncf %40 : vector<4x8x8xf32> to vector<4x8x8xbf16>
      %c0_41 = arith.constant 0 : index
      %c0_42 = arith.constant 0 : index
      %c0_43 = arith.constant 0 : index
      %c0_44 = arith.constant 0 : index
      %42 = vector.load %arg6[%c0_41, %c0_42, %c0_43, %c0_44] : memref<1x4x8x8xbf16, #tpu.memory_space<vmem>>, vector<1x4x8x8xbf16>
      %43 = vector.shape_cast %42 : vector<1x4x8x8xbf16> to vector<4x8x8xbf16>
      %44 = vector.shape_cast %41 : vector<4x8x8xbf16> to vector<1x4x8x8xbf16>
      tpu.vector_store %arg6[%c0_41, %c0_42, %c0_43, %c0_44], %44 {strides = array<i32>} : memref<1x4x8x8xbf16, #tpu.memory_space<vmem>>, vector<1x4x8x8xbf16>,
    } else {
    }
    return
  }
  func.func @transform_0(%arg0: i32, %arg1: i32, %arg2: i32) -> (i32, i32, i32, i32) {
    %c0_i32 = arith.constant 0 : i32
    %c0_i32_0 = arith.constant 0 : i32
    %c0_i32_1 = arith.constant 0 : i32
    return %arg0, %c0_i32, %arg1, %c0_i32_0 : i32, i32, i32, i32
  }
  func.func @transform_1(%arg0: i32, %arg1: i32, %arg2: i32) -> (i32, i32, i32, i32) {
    %c0_i32 = arith.constant 0 : i32
    %c0_i32_0 = arith.constant 0 : i32
    %c0_i32_1 = arith.constant 0 : i32
    return %arg0, %c0_i32, %arg2, %c0_i32_0 : i32, i32, i32, i32
  }
  func.func @transform_2(%arg0: i32, %arg1: i32, %arg2: i32) -> (i32, i32, i32, i32) {
    %c1_i32 = arith.constant 1 : i32
    %c0_i32 = arith.constant 0 : i32
    %c0_i32_0 = arith.constant 0 : i32
    return %arg0, %c1_i32, %arg2, %c0_i32 : i32, i32, i32, i32
  }
  func.func @transform_3(%arg0: i32, %arg1: i32, %arg2: i32) -> (i32, i32, i32, i32) {
    %c0_i32 = arith.constant 0 : i32
    %c0_i32_0 = arith.constant 0 : i32
    %c0_i32_1 = arith.constant 0 : i32
    return %arg0, %c0_i32, %arg1, %c0_i32_0 : i32, i32, i32, i32
  }
}

module attributes {stable_mosaic.version = 11 : i64} {
  func.func @_linear_kernel(%arg0: i32, %arg1: i32, %arg2: memref<8x32xbf16, #tpu.memory_space<vmem>>, %arg3: memref<32x16xbf16, #tpu.memory_space<vmem>>, %arg4: memref<1x16xf32, #tpu.memory_space<vmem>>, %arg5: memref<8x16xf32, #tpu.memory_space<vmem>>) attributes {dimension_semantics = [#tpu.dimension_semantics<parallel>, #tpu.dimension_semantics<parallel>], iteration_bounds = array<i64: 1, 2>, scalar_prefetch = 0 : i64, scratch_operands = 0 : i64, tpu.core_type = #tpu.core_type<tc>, window_params = [{transform_indices = @transform_0, window_bounds = array<i64: 8, 32>}, {pipeline_mode = #tpu.pipeline_mode<synchronous>, transform_indices = @transform_1, window_bounds = array<i64: 32, 16>}, {pipeline_mode = #tpu.pipeline_mode<synchronous>, transform_indices = @transform_2, window_bounds = array<i64: 1, 16>}, {transform_indices = @transform_3, window_bounds = array<i64: 8, 16>}]} {
    %c0 = arith.constant 0 : index
    %c0_0 = arith.constant 0 : index
    %0 = vector.load %arg2[%c0, %c0_0] : memref<8x32xbf16, #tpu.memory_space<vmem>>, vector<8x32xbf16>
    %c0_1 = arith.constant 0 : index
    %c0_2 = arith.constant 0 : index
    %1 = vector.load %arg3[%c0_1, %c0_2] : memref<32x16xbf16, #tpu.memory_space<vmem>>, vector<32x16xbf16>
    %cst = arith.constant dense<0.000000e+00> : vector<8x16xf32>
    %2 = tpu.matmul %0, %1, %cst {dimension_numbers = #tpu.dot_dimension_numbers<[1], [0], [0], [1], [0, 0, 1, 1], [], []>} : vector<8x32xbf16>, vector<32x16xbf16>, vector<8x16xf32> -> vector<8x16xf32>
    %c0_3 = arith.constant 0 : index
    %c0_4 = arith.constant 0 : index
    %3 = vector.load %arg4[%c0_3, %c0_4] : memref<1x16xf32, #tpu.memory_space<vmem>>, vector<1x16xf32>
    %4 = vector.broadcast %3 : vector<1x16xf32> to vector<8x16xf32>
    %5 = arith.addf %2, %4 : vector<8x16xf32>
    %c0_5 = arith.constant 0 : index
    %c0_6 = arith.constant 0 : index
    %6 = vector.load %arg5[%c0_5, %c0_6] : memref<8x16xf32, #tpu.memory_space<vmem>>, vector<8x16xf32>
    tpu.vector_store %arg5[%c0_5, %c0_6], %5 {strides = array<i32>} : memref<8x16xf32, #tpu.memory_space<vmem>>, vector<8x16xf32>,
    return
  }
  func.func @transform_0(%arg0: i32, %arg1: i32) -> (i32, i32) {
    %c0_i32 = arith.constant 0 : i32
    %c0_i32_0 = arith.constant 0 : i32
    return %arg1, %c0_i32 : i32, i32
  }
  func.func @transform_1(%arg0: i32, %arg1: i32) -> (i32, i32) {
    %c0_i32 = arith.constant 0 : i32
    %c0_i32_0 = arith.constant 0 : i32
    return %c0_i32, %arg0 : i32, i32
  }
  func.func @transform_2(%arg0: i32, %arg1: i32) -> (i32, i32) {
    %c0_i32 = arith.constant 0 : i32
    %c0_i32_0 = arith.constant 0 : i32
    return %c0_i32, %arg0 : i32, i32
  }
  func.func @transform_3(%arg0: i32, %arg1: i32) -> (i32, i32) {
    %c0_i32 = arith.constant 0 : i32
    return %arg1, %arg0 : i32, i32
  }
}

</mosaic_0001>

<llo_original>
// kernel: cross_attention_pallas.5
$region0: #{cross_attention_pallas.5}
  #allocation0 [shape = 'u32[]', space=smem, size = 0x4, offset = 0x4, fixed_abs, tag = 'smem constant byte address 0x4 - core index']
  #allocation1 [shape = 'u32[144,128]{1,0:T(1,128)}', space=vmem, size = 0x12000, scoped, tag = 'internal scratch']
  %s0 = inlined_call_operand.hbm [shape: bf16[2,8,16], index: 0, kind: input, shape index: {}]
  %s1 = inlined_call_operand.hbm [shape: bf16[8,16,8], index: 1, kind: input, shape index: {}]
  %s2 = inlined_call_operand.hbm [shape: f32[8,1,8], index: 2, kind: input, shape index: {}]
  %s3 = inlined_call_operand.hbm [shape: bf16[2,8,8,8], index: 3, kind: output, shape index: {}]
  %s4 = sld [smem:[#allocation0]]
  $region57: #{cross_attention_pallas.5} parent=0
    _
  %s6 = ssub.s32 1, %s4
  %s7 = scalar_select 0, %s6, %s4
  $region1: #{cross_attention_pallas.5} parent=0
    #allocation2 [shape = 'u8[4096]{0}', space=vmem, size = 0x1000, scoped, tag = 'input window, operand 0']
    #allocation3 [shape = 's32[2]{0}', space=sflag, size = 0x8, scoped, tag = 'scoped memory for cross_attention_pallas.5']
    #allocation4 [shape = 's32[2]{0}', space=sflag, size = 0x8, scoped, tag = 'scoped memory for cross_attention_pallas.5']
    #allocation5 [shape = 'u8[8192]{0}', space=vmem, size = 0x2000, scoped, tag = 'input window, operand 1']
    #allocation6 [shape = 's32[2]{0}', space=sflag, size = 0x8, scoped, tag = 'scoped memory for cross_attention_pallas.5']
    #allocation7 [shape = 'u8[1024]{0}', space=vmem, size = 0x400, scoped, tag = 'input window, operand 2']
    #allocation8 [shape = 'u8[4096]{0}', space=vmem, size = 0x1000, scoped, tag = 'output window, operand 0']
    %8 = vsyncpa [#allocation3], 0
    %s9 = scalar_lea.sflag [#allocation3], 1
    %10 = vsyncpa %s9, 0
    %11 = vsyncpa [#allocation6], 0
    %s12 = scalar_lea.sflag [#allocation6], 1
    %13 = vsyncpa %s12, 0
    %14 = vsyncpa [#allocation4], 0
    %s15 = scalar_lea.sflag [#allocation4], 1
    %16 = vsyncpa %s15, 0
    loop: start=0, step=1, limit=18
    $region2: #{cross_attention_pallas.5} parent=1 // loop_pre_header
      _
    $region3: #{cross_attention_pallas.5} parent=1 // loop_header
      %s18 = sphi 0, %s22
      %p19 = scmp.ge.s32.totalorder %s18, 18
      %s25 = sphi 0, %s44
      %s26 = sphi 0, %s40
      %s27 = sphi 0, %s36
      %s28 = sphi 0, %s25
      %s29 = sphi 0, %s26
      %s30 = sphi 0, %s27
      %s31 = sphi 0, %s28
      %s32 = sphi 0, %s29
      %s33 = sphi 0, %s30
      %s49 = sphi 0, %s51
      %s52 = sphi 0, %s49
      %s53 = sphi 0, %s52
      %s69 = sphi 0, %s53
      %s75 = sphi 0, %s77
      %s78 = sphi 0, %s75
      %s79 = sphi 0, %s78
      %s95 = sphi 0, %s79
      %s101 = sphi 0, %s103
      %s104 = sphi 0, %s101
      %s105 = sphi 0, %s104
      %s121 = sphi 0, %s105
      %s131 = sphi 0, %s133
      %s134 = sphi 0, %s131
      %s135 = sphi 0, %s134
      %s151 = sphi 0, %s135
    $region4: #{cross_attention_pallas.5} parent=1 // loop_header_branch
      %21 = sbr.rel (%p19) target = $region8
    $region5: #{cross_attention_pallas.5} parent=1 // loop_body
      %s23 = ssub.s32 %s18, 1
      %s24 = ssub.s32 %s18, 2
      %s34 = sadd.s32 1, %s27
      %p35 = scmp.ge.s32.totalorder %s34, 1
      %s36 = scalar_select %p35, 0, %s34
      %s37 = sadd.s32 1, %s26
      %s38 = scalar_select %p35, %s37, %s26
      %p39 = scmp.ge.s32.totalorder %s38, 8
      %s40 = scalar_select %p39, 0, %s38
      %s41 = sadd.s32 1, %s25
      %s42 = scalar_select %p39, %s41, %s25
      %p43 = scmp.ge.s32.totalorder %s42, 2
      %s44 = scalar_select %p43, 0, %s42
      %s45 = ssub.s32 %s25, %s44
      %s46 = ssub.s32 %s27, %s36
      %s47 = sor.u32 %s45, %s46
      %p48 = scmp.eq.s32.totalorder %s47, 0
      %s50 = sadd.s32 %s49, 1
      %s51 = scalar_select %p48, %s49, %s50
      %p54 = pneg %p48
      %p55 = scmp.eq.s32.totalorder %s18, 15
      %p56 = por %p54, %p55
      %p57 = scmp.ne.s32.totalorder %s49, %s52
      %p58 = scmp.eq.s32.totalorder %s18, 0
      %p59 = por %p57, %p58
      %p60 = scmp.ne.s32.totalorder %s49, %s52
      %p61 = scmp.eq.s32.totalorder %s23, 15
      %p62 = por %p60, %p61
      %p63 = scmp.ne.s32.totalorder %s52, %s53
      %p64 = scmp.eq.s32.totalorder %s23, 0
      %p65 = por %p63, %p64
      %p66 = scmp.ne.s32.totalorder %s52, %s53
      %p67 = scmp.eq.s32.totalorder %s24, 15
      %p68 = por %p66, %p67
      %p70 = scmp.ne.s32.totalorder %s53, %s69
      %p71 = scmp.eq.s32.totalorder %s24, 0
      %p72 = por %p70, %p71
      %s73 = ssub.s32 %s26, %s40
      %p74 = scmp.eq.s32.totalorder %s73, 0
      %s76 = sadd.s32 %s75, 1
      %s77 = scalar_select %p74, %s75, %s76
      %p80 = pneg %p74
      %p81 = scmp.eq.s32.totalorder %s18, 15
      %p82 = por %p80, %p81
      %p83 = scmp.ne.s32.totalorder %s75, %s78
      %p84 = scmp.eq.s32.totalorder %s18, 0
      %p85 = por %p83, %p84
      %p86 = scmp.ne.s32.totalorder %s75, %s78
      %p87 = scmp.eq.s32.totalorder %s23, 15
      %p88 = por %p86, %p87
      %p89 = scmp.ne.s32.totalorder %s78, %s79
      %p90 = scmp.eq.s32.totalorder %s23, 0
      %p91 = por %p89, %p90
      %p92 = scmp.ne.s32.totalorder %s78, %s79
      %p93 = scmp.eq.s32.totalorder %s24, 15
      %p94 = por %p92, %p93
      %p96 = scmp.ne.s32.totalorder %s79, %s95
      %p97 = scmp.eq.s32.totalorder %s24, 0
      %p98 = por %p96, %p97
      %s99 = ssub.s32 %s26, %s40
      %p100 = scmp.eq.s32.totalorder %s99, 0
      %s102 = sadd.s32 %s101, 1
      %s103 = scalar_select %p100, %s101, %s102
      %p106 = pneg %p100
      %p107 = scmp.eq.s32.totalorder %s18, 15
      %p108 = por %p106, %p107
      %p109 = scmp.ne.s32.totalorder %s101, %s104
      %p110 = scmp.eq.s32.totalorder %s18, 0
      %p111 = por %p109, %p110
      %p112 = scmp.ne.s32.totalorder %s101, %s104
      %p113 = scmp.eq.s32.totalorder %s23, 15
      %p114 = por %p112, %p113
      %p115 = scmp.ne.s32.totalorder %s104, %s105
      %p116 = scmp.eq.s32.totalorder %s23, 0
      %p117 = por %p115, %p116
      %p118 = scmp.ne.s32.totalorder %s104, %s105
      %p119 = scmp.eq.s32.totalorder %s24, 15
      %p120 = por %p118, %p119
      %p122 = scmp.ne.s32.totalorder %s105, %s121
      %p123 = scmp.eq.s32.totalorder %s24, 0
      %p124 = por %p122, %p123
      %s125 = ssub.s32 %s25, %s44
      %s126 = ssub.s32 %s26, %s40
      %s127 = sor.u32 %s125, %s126
      %s128 = ssub.s32 %s27, %s36
      %s129 = sor.u32 %s127, %s128
      %p130 = scmp.eq.s32.totalorder %s129, 0
      %s132 = sadd.s32 %s131, 1
      %s133 = scalar_select %p130, %s131, %s132
      %p136 = pneg %p130
      %p137 = scmp.eq.s32.totalorder %s18, 15
      %p138 = por %p136, %p137
      %p139 = scmp.ne.s32.totalorder %s131, %s134
      %p140 = scmp.eq.s32.totalorder %s18, 0
      %p141 = por %p139, %p140
      %p142 = scmp.ne.s32.totalorder %s131, %s134
      %p143 = scmp.eq.s32.totalorder %s23, 15
      %p144 = por %p142, %p143
      %p145 = scmp.ne.s32.totalorder %s134, %s135
      %p146 = scmp.eq.s32.totalorder %s23, 0
      %p147 = por %p145, %p146
      %p148 = scmp.ne.s32.totalorder %s134, %s135
      %p149 = scmp.eq.s32.totalorder %s24, 15
      %p150 = por %p148, %p149
      %p152 = scmp.ne.s32.totalorder %s135, %s151
      %p153 = scmp.eq.s32.totalorder %s24, 0
      %p154 = por %p152, %p153
      %p155 = scmp.le.s32.totalorder 1, %s18
      %p156 = scmp.lt.s32.totalorder %s18, 17
      %p157 = pnand %p155, %p156
      %p158 = pneg %p157
      // Predicated region
      $region9: #{cross_attention_pallas.5} parent=5 // pred_check
        _
      $region10: #{cross_attention_pallas.5} parent=5 // pred_check_branch
        %160 = sbr.rel (%p157) target = $region12
      $region11: #{cross_attention_pallas.5} parent=5 // pred_region
        %s161 = ssub.s32 %s18, 1
      $region12: #{cross_attention_pallas.5} parent=5 // pred_fallthru
        _
      %p162 = scmp.lt.s32.totalorder %s18, 16
      // Predicated region
      $region13: #{cross_attention_pallas.5} parent=5 // pred_check
        %p163 = pneg %p162
      $region14: #{cross_attention_pallas.5} parent=5 // pred_check_branch
        %165 = sbr.rel (%p163) target = $region16
      $region15: #{cross_attention_pallas.5} parent=5 // pred_region
        // Predicated region
        $region17: #{cross_attention_pallas.5} parent=15 // pred_check
          %p166 = pneg %p59
        $region18: #{cross_attention_pallas.5} parent=15 // pred_check_branch
          %168 = sbr.rel (%p166) target = $region20
        $region19: #{cross_attention_pallas.5} parent=15 // pred_region
          %s169 = sand.u32 %s49, 1
          %s170 = scalar_lea.sflag [#allocation3], %s169
          %s171 = sand.u32 %s49, 1
          %s172 = smul.addr %s171, 4
          %s173 = scalar_lea.vmem [#allocation2], %s172
          %s175 = ssub.s32 64, 64
          %176 = vsyncadd %s170, %s175
          %s177 = sadd.s32 %s27, %s25
          %s178 = smul.addr %s177, 64
          %s179 = scalar_lea.hbm %s0, %s178
          %s181 = sshll.u32 %s173, 4
          %s182 = int_to_ptr.vmem [resolvable:$true] %s181
          %184 = dma.hbm_to_vmem [thread:$0]  %s179, 64, %s182, %s170
        $region20: #{cross_attention_pallas.5} parent=15 // pred_fallthru
          _
        // Predicated region
        $region21: #{cross_attention_pallas.5} parent=15 // pred_check
          %p185 = pneg %p85
        $region22: #{cross_attention_pallas.5} parent=15 // pred_check_branch
          %187 = sbr.rel (%p185) target = $region24
        $region23: #{cross_attention_pallas.5} parent=15 // pred_region
          %s188 = sand.u32 %s18, 1
          %s189 = scalar_lea.sflag [#allocation6], %s188
          %s190 = sand.u32 %s75, 1
          %s191 = smul.addr %s190, 8
          %s192 = scalar_lea.vmem [#allocation5], %s191
          %s194 = ssub.s32 128, 128
          %195 = vsyncadd %s189, %s194
          %s196 = smul.addr %s26, 2
          %s197 = smul.addr %s196, 64
          %s198 = scalar_lea.hbm %s1, %s197
          %s199 = sshll.u32 %s192, 4
          %s200 = int_to_ptr.vmem [resolvable:$true] %s199
          %205 = dma.hbm_to_vmem [thread:$0]  %s198, 128, %s200, %s189, 64, 64, 4
        $region24: #{cross_attention_pallas.5} parent=15 // pred_fallthru
          _
        // Predicated region
        $region25: #{cross_attention_pallas.5} parent=15 // pred_check
          %p206 = pneg %p111
        $region26: #{cross_attention_pallas.5} parent=15 // pred_check_branch
          %208 = sbr.rel (%p206) target = $region28
        $region27: #{cross_attention_pallas.5} parent=15 // pred_region
          %s209 = sand.u32 %s18, 1
          %s210 = scalar_lea.sflag [#allocation6], %s209
          %s211 = sand.u32 %s101, 1
          %s212 = scalar_lea.vmem [#allocation7], %s211
          %s214 = ssub.s32 16, 16
          %215 = vsyncadd %s210, %s214
          %s216 = smul.addr %s26, 16
          %s217 = scalar_lea.hbm %s2, %s216
          %s219 = sshll.u32 %s212, 4
          %s220 = int_to_ptr.vmem [resolvable:$true] %s219
          %222 = dma.hbm_to_vmem [thread:$0]  %s217, 16, %s220, %s210
        $region28: #{cross_attention_pallas.5} parent=15 // pred_fallthru
          _
      $region16: #{cross_attention_pallas.5} parent=5 // pred_fallthru
        _
      %p223 = scmp.le.s32.totalorder 1, %s18
      %p224 = scmp.lt.s32.totalorder %s18, 17
      %p225 = pnand %p223, %p224
      %p226 = pneg %p225
      // Predicated region
      $region29: #{cross_attention_pallas.5} parent=5 // pred_check
        _
      $region30: #{cross_attention_pallas.5} parent=5 // pred_check_branch
        %228 = sbr.rel (%p225) target = $region32
      $region31: #{cross_attention_pallas.5} parent=5 // pred_region
        %s229 = ssub.s32 %s18, 1
        %s230 = sand.u32 %s52, 1
        %s231 = scalar_lea.sflag [#allocation3], %s230
        %s232 = sand.u32 %s52, 1
        %s233 = smul.addr %s232, 4
        %s234 = scalar_lea.vmem [#allocation2], %s233
        // Predicated region
        $region33: #{cross_attention_pallas.5} parent=31 // pred_check
          %p235 = pneg %p65
        $region34: #{cross_attention_pallas.5} parent=31 // pred_check_branch
          %237 = sbr.rel (%p235) target = $region36
        $region35: #{cross_attention_pallas.5} parent=31 // pred_region
          %238 = dma.done %s231, 64
        $region36: #{cross_attention_pallas.5} parent=31 // pred_fallthru
          _
        %s239 = sand.u32 %s23, 1
        %s240 = scalar_lea.sflag [#allocation6], %s239
        %s241 = sand.u32 %s78, 1
        %s242 = smul.addr %s241, 8
        %s243 = scalar_lea.vmem [#allocation5], %s242
        // Predicated region
        $region37: #{cross_attention_pallas.5} parent=31 // pred_check
          %p244 = pneg %p91
        $region38: #{cross_attention_pallas.5} parent=31 // pred_check_branch
          %246 = sbr.rel (%p244) target = $region40
        $region39: #{cross_attention_pallas.5} parent=31 // pred_region
          %247 = dma.done %s240, 128
        $region40: #{cross_attention_pallas.5} parent=31 // pred_fallthru
          _
        %s248 = sand.u32 %s23, 1
        %s249 = scalar_lea.sflag [#allocation6], %s248
        %s250 = sand.u32 %s104, 1
        %s251 = scalar_lea.vmem [#allocation7], %s250
        // Predicated region
        $region41: #{cross_attention_pallas.5} parent=31 // pred_check
          %p252 = pneg %p117
        $region42: #{cross_attention_pallas.5} parent=31 // pred_check_branch
          %254 = sbr.rel (%p252) target = $region44
        $region43: #{cross_attention_pallas.5} parent=31 // pred_region
          %255 = dma.done %s249, 16
        $region44: #{cross_attention_pallas.5} parent=31 // pred_fallthru
          _
        %s256 = sand.u32 %s52, 1
        %s257 = scalar_lea.sflag [#allocation3], %s256
        %s258 = sand.u32 %s52, 1
        %s259 = smul.addr %s258, 4
        %s260 = scalar_lea.vmem [#allocation2], %s259
        %p261 = pneg %p65
        %p262 = pneg %p62
        %s263 = sand.u32 %s23, 1
        %s264 = scalar_lea.sflag [#allocation6], %s263
        %s265 = sand.u32 %s78, 1
        %s266 = smul.addr %s265, 8
        %s267 = scalar_lea.vmem [#allocation5], %s266
        %p268 = pneg %p91
        %p269 = pneg %p88
        %s270 = sand.u32 %s23, 1
        %s271 = scalar_lea.sflag [#allocation6], %s270
        %s272 = sand.u32 %s104, 1
        %s273 = scalar_lea.vmem [#allocation7], %s272
        %p274 = pneg %p117
        %p275 = pneg %p114
        %p276 = pneg %p147
        %p277 = pneg %p144
        %s278 = sand.u32 %s134, 1
        %s279 = scalar_lea.sflag [#allocation4], %s278
        %s280 = sand.u32 %s134, 1
        %s281 = smul.addr %s280, 4
        %s282 = scalar_lea.vmem [#allocation8], %s281
        %v284 = vld [vmem:[%s234] sm:$0xf]
        %v285 = vld [vmem:[%s243] sm:$0xf]
        %v286 = vld [vmem:[%s243 + $0x4] sm:$0xf]
        %v287 = vld [vmem:[%s251] sm:$0x1]
        %v289 = vlaneseq
        %v290 = vshrl.u32 %v289, 7
        %v291 = vsub.s32 0, %v290
        %v292 = vrot.slane %v287, %v291
        %v296 = vunpack.c.l.b16 %v285
        %v297 = vunpack.c.l.b16 %v286
        %v298 = vpack.c.b16 %v297, %v296
        %vm300 = vcmask 130048
        %v302 = vsel %vm300, %v284, 0
        %304 = vmatprep.subr.bf16.mxu0 0
        %305 = vmatpush1.bf16.msra.mxu0 %v298
        %306 = vmatprep.subr.bf16.mxu0 0
        %307 = vmatpush1.bf16.msra.mxu0 0
        %308 = vmatprep.subr.bf16.mxu0 0
        %309 = vmatpush1.bf16.msra.mxu0 0
        %310 = vmatprep.subr.bf16.mxu0 0
        %311 = vmatpush1.bf16.msra.mxu0 0
        %312 = vmatprep.subr.bf16.mxu0 0
        %313 = vmatpush1.bf16.msra.mxu0 0
        %314 = vmatprep.subr.bf16.mxu0 0
        %315 = vmatpush1.bf16.msra.mxu0 0
        %316 = vmatprep.subr.bf16.mxu0 0
        %317 = vmatpush1.bf16.msra.mxu0 0
        %318 = vmatprep.subr.bf16.mxu0 0
        %319 = vmatpush1.bf16.msra.mxu0 0
        %320 = vmatprep.subr.bf16.mxu0 0
        %321 = vmatpush1.bf16.msra.mxu0 0
        %322 = vmatprep.subr.bf16.mxu0 0
        %323 = vmatpush1.bf16.msra.mxu0 0
        %324 = vmatprep.subr.bf16.mxu0 0
        %325 = vmatpush1.bf16.msra.mxu0 0
        %326 = vmatprep.subr.bf16.mxu0 0
        %327 = vmatpush1.bf16.msra.mxu0 0
        %328 = vmatprep.subr.bf16.mxu0 0
        %329 = vmatpush1.bf16.msra.mxu0 0
        %330 = vmatprep.subr.bf16.mxu0 0
        %331 = vmatpush1.bf16.msra.mxu0 0
        %332 = vmatprep.subr.bf16.mxu0 0
        %333 = vmatpush1.bf16.msra.mxu0 0
        %334 = vmatprep.subr.bf16.mxu0 0
        %335 = vmatpush1.bf16.msra.mxu0 0
        %336 = vmatprep.mubr.bf16.mxu0 0
        %337 = vmatmul.mubr.bf16.gmra.mrb[0].mxu0 %v302
        %v338 = vpop.f32.mrb[0].mxu0
        %v339 = vadd.f32 %v292, %v338
        %v340 = vpop.f32.mrb[0].mxu0
        %v341 = vpop.f32.mrb[0].mxu0
        %v342 = vpop.f32.mrb[0].mxu0
        %343 = vdwg.mxu0
        %v344 = vpack.c.bf16 %v339, %v339
        %vm345 = vcmask 60416
        %346 = vst.msk [vmem:[%s282] sm:$0xf] %vm345, %v344
        %s347 = sand.u32 %s134, 1
        %s348 = scalar_lea.sflag [#allocation4], %s347
        %s349 = sand.u32 %s134, 1
        %s350 = smul.addr %s349, 4
        %s351 = scalar_lea.vmem [#allocation8], %s350
        // Predicated region
        $region45: #{cross_attention_pallas.5} parent=31 // pred_check
          %p352 = pneg %p144
        $region46: #{cross_attention_pallas.5} parent=31 // pred_check_branch
          %354 = sbr.rel (%p352) target = $region48
        $region47: #{cross_attention_pallas.5} parent=31 // pred_region
          %s356 = ssub.s32 64, 64
          %357 = vsyncadd %s348, %s356
          %s358 = sadd.s32 %s30, %s29
          %s359 = smul.addr %s28, 8
          %s360 = sadd.s32 %s358, %s359
          %s361 = smul.addr %s360, 64
          %s362 = scalar_lea.hbm %s3, %s361
          %s364 = sshll.u32 %s351, 4
          %s365 = int_to_ptr.vmem [resolvable:$true] %s364
          %367 = dma.vmem_to_hbm [thread:$0]  %s365, 64, %s362, %s348
        $region48: #{cross_attention_pallas.5} parent=31 // pred_fallthru
          _
      $region32: #{cross_attention_pallas.5} parent=5 // pred_fallthru
        _
      %p368 = scmp.le.s32.totalorder 2, %s18
      // Predicated region
      $region49: #{cross_attention_pallas.5} parent=5 // pred_check
        %p369 = pneg %p368
      $region50: #{cross_attention_pallas.5} parent=5 // pred_check_branch
        %371 = sbr.rel (%p369) target = $region52
      $region51: #{cross_attention_pallas.5} parent=5 // pred_region
        %s372 = ssub.s32 %s18, 2
        // Predicated region
        $region53: #{cross_attention_pallas.5} parent=51 // pred_check
          %p373 = pneg %p150
        $region54: #{cross_attention_pallas.5} parent=51 // pred_check_branch
          %375 = sbr.rel (%p373) target = $region56
        $region55: #{cross_attention_pallas.5} parent=51 // pred_region
          %s376 = sand.u32 %s135, 1
          %s377 = scalar_lea.sflag [#allocation4], %s376
          %s378 = sand.u32 %s135, 1
          %s379 = smul.addr %s378, 4
          %s380 = scalar_lea.vmem [#allocation8], %s379
          %381 = dma.done %s377, 64
        $region56: #{cross_attention_pallas.5} parent=51 // pred_fallthru
          _
      $region52: #{cross_attention_pallas.5} parent=5 // pred_fallthru
        _
    $region6: #{cross_attention_pallas.5} parent=1 // loop_footer
      %s22 = sadd.s32 1, %s18
    $region7: #{cross_attention_pallas.5} parent=1 // loop_footer_branch
      %17 = sbr.rel target = $region3
    $region8: #{cross_attention_pallas.5} parent=1 // loop_exit
      _
    %382 = vsyncpa [#allocation3], 1
    %s383 = scalar_lea.sflag [#allocation3], 1
    %384 = vsyncpa %s383, 1
    %385 = vsyncpa [#allocation6], 1
    %s386 = scalar_lea.sflag [#allocation6], 1
    %387 = vsyncpa %s386, 1
    %388 = vsyncpa [#allocation4], 1
    %s389 = scalar_lea.sflag [#allocation4], 1
    %390 = vsyncpa %s389, 1

// kernel: cross_attention_pallas.4
$region0: #{cross_attention_pallas.4}
  #allocation0 [shape = 'u32[]', space=smem, size = 0x4, offset = 0x4, fixed_abs, tag = 'smem constant byte address 0x4 - core index']
  #allocation1 [shape = 'u32[144,128]{1,0:T(1,128)}', space=vmem, size = 0x12000, scoped, tag = 'internal scratch']
  %s0 = inlined_call_operand.hbm [shape: bf16[2,8,16], index: 0, kind: input, shape index: {}]
  %s1 = inlined_call_operand.hbm [shape: bf16[4,16,8], index: 1, kind: input, shape index: {}]
  %s2 = inlined_call_operand.hbm [shape: f32[4,1,8], index: 2, kind: input, shape index: {}]
  %s3 = inlined_call_operand.hbm [shape: bf16[2,4,8,8], index: 3, kind: output, shape index: {}]
  %s4 = sld [smem:[#allocation0]]
  $region57: #{cross_attention_pallas.4} parent=0
    _
  %s6 = ssub.s32 1, %s4
  %s7 = scalar_select 0, %s6, %s4
  $region1: #{cross_attention_pallas.4} parent=0
    #allocation2 [shape = 'u8[4096]{0}', space=vmem, size = 0x1000, scoped, tag = 'input window, operand 0']
    #allocation3 [shape = 's32[2]{0}', space=sflag, size = 0x8, scoped, tag = 'scoped memory for cross_attention_pallas.4']
    #allocation4 [shape = 's32[2]{0}', space=sflag, size = 0x8, scoped, tag = 'scoped memory for cross_attention_pallas.4']
    #allocation5 [shape = 'u8[8192]{0}', space=vmem, size = 0x2000, scoped, tag = 'input window, operand 1']
    #allocation6 [shape = 's32[2]{0}', space=sflag, size = 0x8, scoped, tag = 'scoped memory for cross_attention_pallas.4']
    #allocation7 [shape = 'u8[1024]{0}', space=vmem, size = 0x400, scoped, tag = 'input window, operand 2']
    #allocation8 [shape = 'u8[4096]{0}', space=vmem, size = 0x1000, scoped, tag = 'output window, operand 0']
    %8 = vsyncpa [#allocation3], 0
    %s9 = scalar_lea.sflag [#allocation3], 1
    %10 = vsyncpa %s9, 0
    %11 = vsyncpa [#allocation6], 0
    %s12 = scalar_lea.sflag [#allocation6], 1
    %13 = vsyncpa %s12, 0
    %14 = vsyncpa [#allocation4], 0
    %s15 = scalar_lea.sflag [#allocation4], 1
    %16 = vsyncpa %s15, 0
    loop: start=0, step=1, limit=10
    $region2: #{cross_attention_pallas.4} parent=1 // loop_pre_header
      _
    $region3: #{cross_attention_pallas.4} parent=1 // loop_header
      %s18 = sphi 0, %s22
      %p19 = scmp.ge.s32.totalorder %s18, 10
      %s25 = sphi 0, %s44
      %s26 = sphi 0, %s40
      %s27 = sphi 0, %s36
      %s28 = sphi 0, %s25
      %s29 = sphi 0, %s26
      %s30 = sphi 0, %s27
      %s31 = sphi 0, %s28
      %s32 = sphi 0, %s29
      %s33 = sphi 0, %s30
      %s49 = sphi 0, %s51
      %s52 = sphi 0, %s49
      %s53 = sphi 0, %s52
      %s69 = sphi 0, %s53
      %s75 = sphi 0, %s77
      %s78 = sphi 0, %s75
      %s79 = sphi 0, %s78
      %s95 = sphi 0, %s79
      %s101 = sphi 0, %s103
      %s104 = sphi 0, %s101
      %s105 = sphi 0, %s104
      %s121 = sphi 0, %s105
      %s131 = sphi 0, %s133
      %s134 = sphi 0, %s131
      %s135 = sphi 0, %s134
      %s151 = sphi 0, %s135
    $region4: #{cross_attention_pallas.4} parent=1 // loop_header_branch
      %21 = sbr.rel (%p19) target = $region8
    $region5: #{cross_attention_pallas.4} parent=1 // loop_body
      %s23 = ssub.s32 %s18, 1
      %s24 = ssub.s32 %s18, 2
      %s34 = sadd.s32 1, %s27
      %p35 = scmp.ge.s32.totalorder %s34, 1
      %s36 = scalar_select %p35, 0, %s34
      %s37 = sadd.s32 1, %s26
      %s38 = scalar_select %p35, %s37, %s26
      %p39 = scmp.ge.s32.totalorder %s38, 4
      %s40 = scalar_select %p39, 0, %s38
      %s41 = sadd.s32 1, %s25
      %s42 = scalar_select %p39, %s41, %s25
      %p43 = scmp.ge.s32.totalorder %s42, 2
      %s44 = scalar_select %p43, 0, %s42
      %s45 = ssub.s32 %s25, %s44
      %s46 = ssub.s32 %s27, %s36
      %s47 = sor.u32 %s45, %s46
      %p48 = scmp.eq.s32.totalorder %s47, 0
      %s50 = sadd.s32 %s49, 1
      %s51 = scalar_select %p48, %s49, %s50
      %p54 = pneg %p48
      %p55 = scmp.eq.s32.totalorder %s18, 7
      %p56 = por %p54, %p55
      %p57 = scmp.ne.s32.totalorder %s49, %s52
      %p58 = scmp.eq.s32.totalorder %s18, 0
      %p59 = por %p57, %p58
      %p60 = scmp.ne.s32.totalorder %s49, %s52
      %p61 = scmp.eq.s32.totalorder %s23, 7
      %p62 = por %p60, %p61
      %p63 = scmp.ne.s32.totalorder %s52, %s53
      %p64 = scmp.eq.s32.totalorder %s23, 0
      %p65 = por %p63, %p64
      %p66 = scmp.ne.s32.totalorder %s52, %s53
      %p67 = scmp.eq.s32.totalorder %s24, 7
      %p68 = por %p66, %p67
      %p70 = scmp.ne.s32.totalorder %s53, %s69
      %p71 = scmp.eq.s32.totalorder %s24, 0
      %p72 = por %p70, %p71
      %s73 = ssub.s32 %s26, %s40
      %p74 = scmp.eq.s32.totalorder %s73, 0
      %s76 = sadd.s32 %s75, 1
      %s77 = scalar_select %p74, %s75, %s76
      %p80 = pneg %p74
      %p81 = scmp.eq.s32.totalorder %s18, 7
      %p82 = por %p80, %p81
      %p83 = scmp.ne.s32.totalorder %s75, %s78
      %p84 = scmp.eq.s32.totalorder %s18, 0
      %p85 = por %p83, %p84
      %p86 = scmp.ne.s32.totalorder %s75, %s78
      %p87 = scmp.eq.s32.totalorder %s23, 7
      %p88 = por %p86, %p87
      %p89 = scmp.ne.s32.totalorder %s78, %s79
      %p90 = scmp.eq.s32.totalorder %s23, 0
      %p91 = por %p89, %p90
      %p92 = scmp.ne.s32.totalorder %s78, %s79
      %p93 = scmp.eq.s32.totalorder %s24, 7
      %p94 = por %p92, %p93
      %p96 = scmp.ne.s32.totalorder %s79, %s95
      %p97 = scmp.eq.s32.totalorder %s24, 0
      %p98 = por %p96, %p97
      %s99 = ssub.s32 %s26, %s40
      %p100 = scmp.eq.s32.totalorder %s99, 0
      %s102 = sadd.s32 %s101, 1
      %s103 = scalar_select %p100, %s101, %s102
      %p106 = pneg %p100
      %p107 = scmp.eq.s32.totalorder %s18, 7
      %p108 = por %p106, %p107
      %p109 = scmp.ne.s32.totalorder %s101, %s104
      %p110 = scmp.eq.s32.totalorder %s18, 0
      %p111 = por %p109, %p110
      %p112 = scmp.ne.s32.totalorder %s101, %s104
      %p113 = scmp.eq.s32.totalorder %s23, 7
      %p114 = por %p112, %p113
      %p115 = scmp.ne.s32.totalorder %s104, %s105
      %p116 = scmp.eq.s32.totalorder %s23, 0
      %p117 = por %p115, %p116
      %p118 = scmp.ne.s32.totalorder %s104, %s105
      %p119 = scmp.eq.s32.totalorder %s24, 7
      %p120 = por %p118, %p119
      %p122 = scmp.ne.s32.totalorder %s105, %s121
      %p123 = scmp.eq.s32.totalorder %s24, 0
      %p124 = por %p122, %p123
      %s125 = ssub.s32 %s25, %s44
      %s126 = ssub.s32 %s26, %s40
      %s127 = sor.u32 %s125, %s126
      %s128 = ssub.s32 %s27, %s36
      %s129 = sor.u32 %s127, %s128
      %p130 = scmp.eq.s32.totalorder %s129, 0
      %s132 = sadd.s32 %s131, 1
      %s133 = scalar_select %p130, %s131, %s132
      %p136 = pneg %p130
      %p137 = scmp.eq.s32.totalorder %s18, 7
      %p138 = por %p136, %p137
      %p139 = scmp.ne.s32.totalorder %s131, %s134
      %p140 = scmp.eq.s32.totalorder %s18, 0
      %p141 = por %p139, %p140
      %p142 = scmp.ne.s32.totalorder %s131, %s134
      %p143 = scmp.eq.s32.totalorder %s23, 7
      %p144 = por %p142, %p143
      %p145 = scmp.ne.s32.totalorder %s134, %s135
      %p146 = scmp.eq.s32.totalorder %s23, 0
      %p147 = por %p145, %p146
      %p148 = scmp.ne.s32.totalorder %s134, %s135
      %p149 = scmp.eq.s32.totalorder %s24, 7
      %p150 = por %p148, %p149
      %p152 = scmp.ne.s32.totalorder %s135, %s151
      %p153 = scmp.eq.s32.totalorder %s24, 0
      %p154 = por %p152, %p153
      %p155 = scmp.le.s32.totalorder 1, %s18
      %p156 = scmp.lt.s32.totalorder %s18, 9
      %p157 = pnand %p155, %p156
      %p158 = pneg %p157
      // Predicated region
      $region9: #{cross_attention_pallas.4} parent=5 // pred_check
        _
      $region10: #{cross_attention_pallas.4} parent=5 // pred_check_branch
        %160 = sbr.rel (%p157) target = $region12
      $region11: #{cross_attention_pallas.4} parent=5 // pred_region
        %s161 = ssub.s32 %s18, 1
      $region12: #{cross_attention_pallas.4} parent=5 // pred_fallthru
        _
      %p162 = scmp.lt.s32.totalorder %s18, 8
      // Predicated region
      $region13: #{cross_attention_pallas.4} parent=5 // pred_check
        %p163 = pneg %p162
      $region14: #{cross_attention_pallas.4} parent=5 // pred_check_branch
        %165 = sbr.rel (%p163) target = $region16
      $region15: #{cross_attention_pallas.4} parent=5 // pred_region
        // Predicated region
        $region17: #{cross_attention_pallas.4} parent=15 // pred_check
          %p166 = pneg %p59
        $region18: #{cross_attention_pallas.4} parent=15 // pred_check_branch
          %168 = sbr.rel (%p166) target = $region20
        $region19: #{cross_attention_pallas.4} parent=15 // pred_region
          %s169 = sand.u32 %s49, 1
          %s170 = scalar_lea.sflag [#allocation3], %s169
          %s171 = sand.u32 %s49, 1
          %s172 = smul.addr %s171, 4
          %s173 = scalar_lea.vmem [#allocation2], %s172
          %s175 = ssub.s32 64, 64
          %176 = vsyncadd %s170, %s175
          %s177 = sadd.s32 %s27, %s25
          %s178 = smul.addr %s177, 64
          %s179 = scalar_lea.hbm %s0, %s178
          %s181 = sshll.u32 %s173, 4
          %s182 = int_to_ptr.vmem [resolvable:$true] %s181
          %184 = dma.hbm_to_vmem [thread:$0]  %s179, 64, %s182, %s170
        $region20: #{cross_attention_pallas.4} parent=15 // pred_fallthru
          _
        // Predicated region
        $region21: #{cross_attention_pallas.4} parent=15 // pred_check
          %p185 = pneg %p85
        $region22: #{cross_attention_pallas.4} parent=15 // pred_check_branch
          %187 = sbr.rel (%p185) target = $region24
        $region23: #{cross_attention_pallas.4} parent=15 // pred_region
          %s188 = sand.u32 %s18, 1
          %s189 = scalar_lea.sflag [#allocation6], %s188
          %s190 = sand.u32 %s75, 1
          %s191 = smul.addr %s190, 8
          %s192 = scalar_lea.vmem [#allocation5], %s191
          %s194 = ssub.s32 128, 128
          %195 = vsyncadd %s189, %s194
          %s196 = smul.addr %s26, 2
          %s197 = smul.addr %s196, 64
          %s198 = scalar_lea.hbm %s1, %s197
          %s199 = sshll.u32 %s192, 4
          %s200 = int_to_ptr.vmem [resolvable:$true] %s199
          %205 = dma.hbm_to_vmem [thread:$0]  %s198, 128, %s200, %s189, 64, 64, 4
        $region24: #{cross_attention_pallas.4} parent=15 // pred_fallthru
          _
        // Predicated region
        $region25: #{cross_attention_pallas.4} parent=15 // pred_check
          %p206 = pneg %p111
        $region26: #{cross_attention_pallas.4} parent=15 // pred_check_branch
          %208 = sbr.rel (%p206) target = $region28
        $region27: #{cross_attention_pallas.4} parent=15 // pred_region
          %s209 = sand.u32 %s18, 1
          %s210 = scalar_lea.sflag [#allocation6], %s209
          %s211 = sand.u32 %s101, 1
          %s212 = scalar_lea.vmem [#allocation7], %s211
          %s214 = ssub.s32 16, 16
          %215 = vsyncadd %s210, %s214
          %s216 = smul.addr %s26, 16
          %s217 = scalar_lea.hbm %s2, %s216
          %s219 = sshll.u32 %s212, 4
          %s220 = int_to_ptr.vmem [resolvable:$true] %s219
          %222 = dma.hbm_to_vmem [thread:$0]  %s217, 16, %s220, %s210
        $region28: #{cross_attention_pallas.4} parent=15 // pred_fallthru
          _
      $region16: #{cross_attention_pallas.4} parent=5 // pred_fallthru
        _
      %p223 = scmp.le.s32.totalorder 1, %s18
      %p224 = scmp.lt.s32.totalorder %s18, 9
      %p225 = pnand %p223, %p224
      %p226 = pneg %p225
      // Predicated region
      $region29: #{cross_attention_pallas.4} parent=5 // pred_check
        _
      $region30: #{cross_attention_pallas.4} parent=5 // pred_check_branch
        %228 = sbr.rel (%p225) target = $region32
      $region31: #{cross_attention_pallas.4} parent=5 // pred_region
        %s229 = ssub.s32 %s18, 1
        %s230 = sand.u32 %s52, 1
        %s231 = scalar_lea.sflag [#allocation3], %s230
        %s232 = sand.u32 %s52, 1
        %s233 = smul.addr %s232, 4
        %s234 = scalar_lea.vmem [#allocation2], %s233
        // Predicated region
        $region33: #{cross_attention_pallas.4} parent=31 // pred_check
          %p235 = pneg %p65
        $region34: #{cross_attention_pallas.4} parent=31 // pred_check_branch
          %237 = sbr.rel (%p235) target = $region36
        $region35: #{cross_attention_pallas.4} parent=31 // pred_region
          %238 = dma.done %s231, 64
        $region36: #{cross_attention_pallas.4} parent=31 // pred_fallthru
          _
        %s239 = sand.u32 %s23, 1
        %s240 = scalar_lea.sflag [#allocation6], %s239
        %s241 = sand.u32 %s78, 1
        %s242 = smul.addr %s241, 8
        %s243 = scalar_lea.vmem [#allocation5], %s242
        // Predicated region
        $region37: #{cross_attention_pallas.4} parent=31 // pred_check
          %p244 = pneg %p91
        $region38: #{cross_attention_pallas.4} parent=31 // pred_check_branch
          %246 = sbr.rel (%p244) target = $region40
        $region39: #{cross_attention_pallas.4} parent=31 // pred_region
          %247 = dma.done %s240, 128
        $region40: #{cross_attention_pallas.4} parent=31 // pred_fallthru
          _
        %s248 = sand.u32 %s23, 1
        %s249 = scalar_lea.sflag [#allocation6], %s248
        %s250 = sand.u32 %s104, 1
        %s251 = scalar_lea.vmem [#allocation7], %s250
        // Predicated region
        $region41: #{cross_attention_pallas.4} parent=31 // pred_check
          %p252 = pneg %p117
        $region42: #{cross_attention_pallas.4} parent=31 // pred_check_branch
          %254 = sbr.rel (%p252) target = $region44
        $region43: #{cross_attention_pallas.4} parent=31 // pred_region
          %255 = dma.done %s249, 16
        $region44: #{cross_attention_pallas.4} parent=31 // pred_fallthru
          _
        %s256 = sand.u32 %s52, 1
        %s257 = scalar_lea.sflag [#allocation3], %s256
        %s258 = sand.u32 %s52, 1
        %s259 = smul.addr %s258, 4
        %s260 = scalar_lea.vmem [#allocation2], %s259
        %p261 = pneg %p65
        %p262 = pneg %p62
        %s263 = sand.u32 %s23, 1
        %s264 = scalar_lea.sflag [#allocation6], %s263
        %s265 = sand.u32 %s78, 1
        %s266 = smul.addr %s265, 8
        %s267 = scalar_lea.vmem [#allocation5], %s266
        %p268 = pneg %p91
        %p269 = pneg %p88
        %s270 = sand.u32 %s23, 1
        %s271 = scalar_lea.sflag [#allocation6], %s270
        %s272 = sand.u32 %s104, 1
        %s273 = scalar_lea.vmem [#allocation7], %s272
        %p274 = pneg %p117
        %p275 = pneg %p114
        %p276 = pneg %p147
        %p277 = pneg %p144
        %s278 = sand.u32 %s134, 1
        %s279 = scalar_lea.sflag [#allocation4], %s278
        %s280 = sand.u32 %s134, 1
        %s281 = smul.addr %s280, 4
        %s282 = scalar_lea.vmem [#allocation8], %s281
        %v284 = vld [vmem:[%s234] sm:$0xf]
        %v285 = vld [vmem:[%s243] sm:$0xf]
        %v286 = vld [vmem:[%s243 + $0x4] sm:$0xf]
        %v287 = vld [vmem:[%s251] sm:$0x1]
        %v289 = vlaneseq
        %v290 = vshrl.u32 %v289, 7
        %v291 = vsub.s32 0, %v290
        %v292 = vrot.slane %v287, %v291
        %v296 = vunpack.c.l.b16 %v285
        %v297 = vunpack.c.l.b16 %v286
        %v298 = vpack.c.b16 %v297, %v296
        %vm300 = vcmask 130048
        %v302 = vsel %vm300, %v284, 0
        %304 = vmatprep.subr.bf16.mxu0 0
        %305 = vmatpush1.bf16.msra.mxu0 %v298
        %306 = vmatprep.subr.bf16.mxu0 0
        %307 = vmatpush1.bf16.msra.mxu0 0
        %308 = vmatprep.subr.bf16.mxu0 0
        %309 = vmatpush1.bf16.msra.mxu0 0
        %310 = vmatprep.subr.bf16.mxu0 0
        %311 = vmatpush1.bf16.msra.mxu0 0
        %312 = vmatprep.subr.bf16.mxu0 0
        %313 = vmatpush1.bf16.msra.mxu0 0
        %314 = vmatprep.subr.bf16.mxu0 0
        %315 = vmatpush1.bf16.msra.mxu0 0
        %316 = vmatprep.subr.bf16.mxu0 0
        %317 = vmatpush1.bf16.msra.mxu0 0
        %318 = vmatprep.subr.bf16.mxu0 0
        %319 = vmatpush1.bf16.msra.mxu0 0
        %320 = vmatprep.subr.bf16.mxu0 0
        %321 = vmatpush1.bf16.msra.mxu0 0
        %322 = vmatprep.subr.bf16.mxu0 0
        %323 = vmatpush1.bf16.msra.mxu0 0
        %324 = vmatprep.subr.bf16.mxu0 0
        %325 = vmatpush1.bf16.msra.mxu0 0
        %326 = vmatprep.subr.bf16.mxu0 0
        %327 = vmatpush1.bf16.msra.mxu0 0
        %328 = vmatprep.subr.bf16.mxu0 0
        %329 = vmatpush1.bf16.msra.mxu0 0
        %330 = vmatprep.subr.bf16.mxu0 0
        %331 = vmatpush1.bf16.msra.mxu0 0
        %332 = vmatprep.subr.bf16.mxu0 0
        %333 = vmatpush1.bf16.msra.mxu0 0
        %334 = vmatprep.subr.bf16.mxu0 0
        %335 = vmatpush1.bf16.msra.mxu0 0
        %336 = vmatprep.mubr.bf16.mxu0 0
        %337 = vmatmul.mubr.bf16.gmra.mrb[0].mxu0 %v302
        %v338 = vpop.f32.mrb[0].mxu0
        %v339 = vadd.f32 %v292, %v338
        %v340 = vpop.f32.mrb[0].mxu0
        %v341 = vpop.f32.mrb[0].mxu0
        %v342 = vpop.f32.mrb[0].mxu0
        %343 = vdwg.mxu0
        %v344 = vpack.c.bf16 %v339, %v339
        %vm345 = vcmask 60416
        %346 = vst.msk [vmem:[%s282] sm:$0xf] %vm345, %v344
        %s347 = sand.u32 %s134, 1
        %s348 = scalar_lea.sflag [#allocation4], %s347
        %s349 = sand.u32 %s134, 1
        %s350 = smul.addr %s349, 4
        %s351 = scalar_lea.vmem [#allocation8], %s350
        // Predicated region
        $region45: #{cross_attention_pallas.4} parent=31 // pred_check
          %p352 = pneg %p144
        $region46: #{cross_attention_pallas.4} parent=31 // pred_check_branch
          %354 = sbr.rel (%p352) target = $region48
        $region47: #{cross_attention_pallas.4} parent=31 // pred_region
          %s356 = ssub.s32 64, 64
          %357 = vsyncadd %s348, %s356
          %s358 = sadd.s32 %s30, %s29
          %s359 = smul.addr %s28, 4
          %s360 = sadd.s32 %s358, %s359
          %s361 = smul.addr %s360, 64
          %s362 = scalar_lea.hbm %s3, %s361
          %s364 = sshll.u32 %s351, 4
          %s365 = int_to_ptr.vmem [resolvable:$true] %s364
          %367 = dma.vmem_to_hbm [thread:$0]  %s365, 64, %s362, %s348
        $region48: #{cross_attention_pallas.4} parent=31 // pred_fallthru
          _
      $region32: #{cross_attention_pallas.4} parent=5 // pred_fallthru
        _
      %p368 = scmp.le.s32.totalorder 2, %s18
      // Predicated region
      $region49: #{cross_attention_pallas.4} parent=5 // pred_check
        %p369 = pneg %p368
      $region50: #{cross_attention_pallas.4} parent=5 // pred_check_branch
        %371 = sbr.rel (%p369) target = $region52
      $region51: #{cross_attention_pallas.4} parent=5 // pred_region
        %s372 = ssub.s32 %s18, 2
        // Predicated region
        $region53: #{cross_attention_pallas.4} parent=51 // pred_check
          %p373 = pneg %p150
        $region54: #{cross_attention_pallas.4} parent=51 // pred_check_branch
          %375 = sbr.rel (%p373) target = $region56
        $region55: #{cross_attention_pallas.4} parent=51 // pred_region
          %s376 = sand.u32 %s135, 1
          %s377 = scalar_lea.sflag [#allocation4], %s376
          %s378 = sand.u32 %s135, 1
          %s379 = smul.addr %s378, 4
          %s380 = scalar_lea.vmem [#allocation8], %s379
          %381 = dma.done %s377, 64
        $region56: #{cross_attention_pallas.4} parent=51 // pred_fallthru
          _
      $region52: #{cross_attention_pallas.4} parent=5 // pred_fallthru
        _
    $region6: #{cross_attention_pallas.4} parent=1 // loop_footer
      %s22 = sadd.s32 1, %s18
    $region7: #{cross_attention_pallas.4} parent=1 // loop_footer_branch
      %17 = sbr.rel target = $region3
    $region8: #{cross_attention_pallas.4} parent=1 // loop_exit
      _
    %382 = vsyncpa [#allocation3], 1
    %s383 = scalar_lea.sflag [#allocation3], 1
    %384 = vsyncpa %s383, 1
    %385 = vsyncpa [#allocation6], 1
    %s386 = scalar_lea.sflag [#allocation6], 1
    %387 = vsyncpa %s386, 1
    %388 = vsyncpa [#allocation4], 1
    %s389 = scalar_lea.sflag [#allocation4], 1
    %390 = vsyncpa %s389, 1

// kernel: cross_attention_pallas.6
$region0: #{cross_attention_pallas.6}
  #allocation0 [shape = 'u32[]', space=smem, size = 0x4, offset = 0x4, fixed_abs, tag = 'smem constant byte address 0x4 - core index']
  #allocation1 [shape = 'u32[144,128]{1,0:T(1,128)}', space=vmem, size = 0x12000, scoped, tag = 'internal scratch']
  #allocation2 [shape = 'f32[4,8,1]{2,1,0:T(8,128)}', space=vmem, size = 0x4000, scoped, tag = 'scratch operand']
  #allocation3 [shape = 'f32[4,8,1]{2,1,0:T(8,128)}', space=vmem, size = 0x4000, scoped, tag = 'scratch operand']
  #allocation4 [shape = 'f32[4,8,8]{2,1,0:T(8,128)}', space=vmem, size = 0x4000, scoped, tag = 'scratch operand']
  %s0 = inlined_call_operand.hbm [shape: bf16[2,4,8,8], index: 0, kind: input, shape index: {}]
  %s1 = inlined_call_operand.hbm [shape: bf16[2,8,8,8], index: 1, kind: input, shape index: {}, may-alias: {1,2}]
  %s2 = inlined_call_operand.hbm [shape: bf16[2,8,8,8], index: 2, kind: input, shape index: {}, may-alias: {1,2}]
  %s3 = inlined_call_operand.hbm [shape: bf16[2,4,8,8], index: 3, kind: output, shape index: {}]
  %s4 = sld [smem:[#allocation0]]
  $region65: #{cross_attention_pallas.6} parent=0
    _
  %s6 = ssub.s32 1, %s4
  %s7 = scalar_select 0, %s6, %s4
  $region1: #{cross_attention_pallas.6} parent=0
    #allocation5 [shape = 'u8[16384]{0}', space=vmem, size = 0x4000, scoped, tag = 'input window, operand 0']
    #allocation6 [shape = 's32[2]{0}', space=sflag, size = 0x8, scoped, tag = 'scoped memory for cross_attention_pallas.6']
    #allocation7 [shape = 's32[2]{0}', space=sflag, size = 0x8, scoped, tag = 'scoped memory for cross_attention_pallas.6']
    #allocation8 [shape = 'u8[16384]{0}', space=vmem, size = 0x4000, scoped, tag = 'input window, operand 1']
    #allocation9 [shape = 's32[2]{0}', space=sflag, size = 0x8, scoped, tag = 'scoped memory for cross_attention_pallas.6']
    #allocation10 [shape = 'u8[16384]{0}', space=vmem, size = 0x4000, scoped, tag = 'input window, operand 2']
    #allocation11 [shape = 'u8[16384]{0}', space=vmem, size = 0x4000, scoped, tag = 'output window, operand 0']
    %8 = vsyncpa [#allocation6], 0
    %s9 = scalar_lea.sflag [#allocation6], 1
    %10 = vsyncpa %s9, 0
    %11 = vsyncpa [#allocation9], 0
    %s12 = scalar_lea.sflag [#allocation9], 1
    %13 = vsyncpa %s12, 0
    %14 = vsyncpa [#allocation7], 0
    %s15 = scalar_lea.sflag [#allocation7], 1
    %16 = vsyncpa %s15, 0
    loop: start=0, step=1, limit=4
    $region2: #{cross_attention_pallas.6} parent=1 // loop_pre_header
      _
    $region3: #{cross_attention_pallas.6} parent=1 // loop_header
      %s18 = sphi 0, %s22
      %p19 = scmp.ge.s32.totalorder %s18, 4
      %s25 = sphi 0, %s44
      %s26 = sphi 0, %s40
      %s27 = sphi 0, %s36
      %s28 = sphi 0, %s25
      %s29 = sphi 0, %s26
      %s30 = sphi 0, %s27
      %s31 = sphi 0, %s28
      %s32 = sphi 0, %s29
      %s33 = sphi 0, %s30
      %s49 = sphi 0, %s51
      %s52 = sphi 0, %s49
      %s53 = sphi 0, %s52
      %s69 = sphi 0, %s53
      %s77 = sphi 0, %s79
      %s80 = sphi 0, %s77
      %s81 = sphi 0, %s80
      %s97 = sphi 0, %s81
      %s105 = sphi 0, %s107
      %s108 = sphi 0, %s105
      %s109 = sphi 0, %s108
      %s125 = sphi 0, %s109
      %s133 = sphi 0, %s135
      %s136 = sphi 0, %s133
      %s137 = sphi 0, %s136
      %s153 = sphi 0, %s137
    $region4: #{cross_attention_pallas.6} parent=1 // loop_header_branch
      %21 = sbr.rel (%p19) target = $region8
    $region5: #{cross_attention_pallas.6} parent=1 // loop_body
      %s23 = ssub.s32 %s18, 1
      %s24 = ssub.s32 %s18, 2
      %s34 = sadd.s32 1, %s27
      %p35 = scmp.ge.s32.totalorder %s34, 1
      %s36 = scalar_select %p35, 0, %s34
      %s37 = sadd.s32 1, %s26
      %s38 = scalar_select %p35, %s37, %s26
      %p39 = scmp.ge.s32.totalorder %s38, 1
      %s40 = scalar_select %p39, 0, %s38
      %s41 = sadd.s32 1, %s25
      %s42 = scalar_select %p39, %s41, %s25
      %p43 = scmp.ge.s32.totalorder %s42, 2
      %s44 = scalar_select %p43, 0, %s42
      %s45 = ssub.s32 %s25, %s44
      %s46 = ssub.s32 %s26, %s40
      %s47 = sor.u32 %s45, %s46
      %p48 = scmp.eq.s32.totalorder %s47, 0
      %s50 = sadd.s32 %s49, 1
      %s51 = scalar_select %p48, %s49, %s50
      %p54 = pneg %p48
      %p55 = scmp.eq.s32.totalorder %s18, 1
      %p56 = por %p54, %p55
      %p57 = scmp.ne.s32.totalorder %s49, %s52
      %p58 = scmp.eq.s32.totalorder %s18, 0
      %p59 = por %p57, %p58
      %p60 = scmp.ne.s32.totalorder %s49, %s52
      %p61 = scmp.eq.s32.totalorder %s23, 1
      %p62 = por %p60, %p61
      %p63 = scmp.ne.s32.totalorder %s52, %s53
      %p64 = scmp.eq.s32.totalorder %s23, 0
      %p65 = por %p63, %p64
      %p66 = scmp.ne.s32.totalorder %s52, %s53
      %p67 = scmp.eq.s32.totalorder %s24, 1
      %p68 = por %p66, %p67
      %p70 = scmp.ne.s32.totalorder %s53, %s69
      %p71 = scmp.eq.s32.totalorder %s24, 0
      %p72 = por %p70, %p71
      %s73 = ssub.s32 %s25, %s44
      %s74 = ssub.s32 %s27, %s36
      %s75 = sor.u32 %s73, %s74
      %p76 = scmp.eq.s32.totalorder %s75, 0
      %s78 = sadd.s32 %s77, 1
      %s79 = scalar_select %p76, %s77, %s78
      %p82 = pneg %p76
      %p83 = scmp.eq.s32.totalorder %s18, 1
      %p84 = por %p82, %p83
      %p85 = scmp.ne.s32.totalorder %s77, %s80
      %p86 = scmp.eq.s32.totalorder %s18, 0
      %p87 = por %p85, %p86
      %p88 = scmp.ne.s32.totalorder %s77, %s80
      %p89 = scmp.eq.s32.totalorder %s23, 1
      %p90 = por %p88, %p89
      %p91 = scmp.ne.s32.totalorder %s80, %s81
      %p92 = scmp.eq.s32.totalorder %s23, 0
      %p93 = por %p91, %p92
      %p94 = scmp.ne.s32.totalorder %s80, %s81
      %p95 = scmp.eq.s32.totalorder %s24, 1
      %p96 = por %p94, %p95
      %p98 = scmp.ne.s32.totalorder %s81, %s97
      %p99 = scmp.eq.s32.totalorder %s24, 0
      %p100 = por %p98, %p99
      %s101 = ssub.s32 %s25, %s44
      %s102 = ssub.s32 %s27, %s36
      %s103 = sor.u32 %s101, %s102
      %p104 = scmp.eq.s32.totalorder %s103, 0
      %s106 = sadd.s32 %s105, 1
      %s107 = scalar_select %p104, %s105, %s106
      %p110 = pneg %p104
      %p111 = scmp.eq.s32.totalorder %s18, 1
      %p112 = por %p110, %p111
      %p113 = scmp.ne.s32.totalorder %s105, %s108
      %p114 = scmp.eq.s32.totalorder %s18, 0
      %p115 = por %p113, %p114
      %p116 = scmp.ne.s32.totalorder %s105, %s108
      %p117 = scmp.eq.s32.totalorder %s23, 1
      %p118 = por %p116, %p117
      %p119 = scmp.ne.s32.totalorder %s108, %s109
      %p120 = scmp.eq.s32.totalorder %s23, 0
      %p121 = por %p119, %p120
      %p122 = scmp.ne.s32.totalorder %s108, %s109
      %p123 = scmp.eq.s32.totalorder %s24, 1
      %p124 = por %p122, %p123
      %p126 = scmp.ne.s32.totalorder %s109, %s125
      %p127 = scmp.eq.s32.totalorder %s24, 0
      %p128 = por %p126, %p127
      %s129 = ssub.s32 %s25, %s44
      %s130 = ssub.s32 %s26, %s40
      %s131 = sor.u32 %s129, %s130
      %p132 = scmp.eq.s32.totalorder %s131, 0
      %s134 = sadd.s32 %s133, 1
      %s135 = scalar_select %p132, %s133, %s134
      %p138 = pneg %p132
      %p139 = scmp.eq.s32.totalorder %s18, 1
      %p140 = por %p138, %p139
      %p141 = scmp.ne.s32.totalorder %s133, %s136
      %p142 = scmp.eq.s32.totalorder %s18, 0
      %p143 = por %p141, %p142
      %p144 = scmp.ne.s32.totalorder %s133, %s136
      %p145 = scmp.eq.s32.totalorder %s23, 1
      %p146 = por %p144, %p145
      %p147 = scmp.ne.s32.totalorder %s136, %s137
      %p148 = scmp.eq.s32.totalorder %s23, 0
      %p149 = por %p147, %p148
      %p150 = scmp.ne.s32.totalorder %s136, %s137
      %p151 = scmp.eq.s32.totalorder %s24, 1
      %p152 = por %p150, %p151
      %p154 = scmp.ne.s32.totalorder %s137, %s153
      %p155 = scmp.eq.s32.totalorder %s24, 0
      %p156 = por %p154, %p155
      %p157 = scmp.le.s32.totalorder 1, %s18
      %p158 = scmp.lt.s32.totalorder %s18, 3
      %p159 = pnand %p157, %p158
      %p160 = pneg %p159
      // Predicated region
      $region9: #{cross_attention_pallas.6} parent=5 // pred_check
        _
      $region10: #{cross_attention_pallas.6} parent=5 // pred_check_branch
        %162 = sbr.rel (%p159) target = $region12
      $region11: #{cross_attention_pallas.6} parent=5 // pred_region
        %s163 = ssub.s32 %s18, 1
      $region12: #{cross_attention_pallas.6} parent=5 // pred_fallthru
        _
      %p164 = scmp.lt.s32.totalorder %s18, 2
      // Predicated region
      $region13: #{cross_attention_pallas.6} parent=5 // pred_check
        %p165 = pneg %p164
      $region14: #{cross_attention_pallas.6} parent=5 // pred_check_branch
        %167 = sbr.rel (%p165) target = $region16
      $region15: #{cross_attention_pallas.6} parent=5 // pred_region
        // Predicated region
        $region17: #{cross_attention_pallas.6} parent=15 // pred_check
          %p168 = pneg %p59
        $region18: #{cross_attention_pallas.6} parent=15 // pred_check_branch
          %170 = sbr.rel (%p168) target = $region20
        $region19: #{cross_attention_pallas.6} parent=15 // pred_region
          %s171 = sand.u32 %s49, 1
          %s172 = scalar_lea.sflag [#allocation6], %s171
          %s173 = sand.u32 %s49, 1
          %s174 = smul.addr %s173, 16
          %s175 = scalar_lea.vmem [#allocation5], %s174
          %s177 = ssub.s32 256, 256
          %178 = vsyncadd %s172, %s177
          %s179 = smul.addr %s25, 4
          %s180 = sadd.s32 %s26, %s179
          %s181 = smul.addr %s180, 64
          %s182 = scalar_lea.hbm %s0, %s181
          %s183 = sshll.u32 %s175, 4
          %s184 = int_to_ptr.vmem [resolvable:$true] %s183
          %189 = dma.hbm_to_vmem [thread:$0]  %s182, 256, %s184, %s172, 64, 64, 4
        $region20: #{cross_attention_pallas.6} parent=15 // pred_fallthru
          _
        // Predicated region
        $region21: #{cross_attention_pallas.6} parent=15 // pred_check
          %p190 = pneg %p87
        $region22: #{cross_attention_pallas.6} parent=15 // pred_check_branch
          %192 = sbr.rel (%p190) target = $region24
        $region23: #{cross_attention_pallas.6} parent=15 // pred_region
          %s193 = sand.u32 %s18, 1
          %s194 = scalar_lea.sflag [#allocation9], %s193
          %s195 = sand.u32 %s77, 1
          %s196 = smul.addr %s195, 16
          %s197 = scalar_lea.vmem [#allocation8], %s196
          %s199 = ssub.s32 256, 256
          %200 = vsyncadd %s194, %s199
          %s201 = smul.addr %s25, 8
          %s202 = sadd.s32 %s27, %s201
          %s203 = smul.addr %s202, 64
          %s204 = scalar_lea.hbm %s1, %s203
          %s205 = sshll.u32 %s197, 4
          %s206 = int_to_ptr.vmem [resolvable:$true] %s205
          %211 = dma.hbm_to_vmem [thread:$0]  %s204, 256, %s206, %s194, 64, 64, 4
        $region24: #{cross_attention_pallas.6} parent=15 // pred_fallthru
          _
        // Predicated region
        $region25: #{cross_attention_pallas.6} parent=15 // pred_check
          %p212 = pneg %p115
        $region26: #{cross_attention_pallas.6} parent=15 // pred_check_branch
          %214 = sbr.rel (%p212) target = $region28
        $region27: #{cross_attention_pallas.6} parent=15 // pred_region
          %s215 = sand.u32 %s18, 1
          %s216 = scalar_lea.sflag [#allocation9], %s215
          %s217 = sand.u32 %s105, 1
          %s218 = smul.addr %s217, 16
          %s219 = scalar_lea.vmem [#allocation10], %s218
          %s221 = ssub.s32 256, 256
          %222 = vsyncadd %s216, %s221
          %s223 = sadd.s32 %s27, 4
          %s224 = smul.addr %s25, 8
          %s225 = sadd.s32 %s223, %s224
          %s226 = smul.addr %s225, 64
          %s227 = scalar_lea.hbm %s2, %s226
          %s228 = sshll.u32 %s219, 4
          %s229 = int_to_ptr.vmem [resolvable:$true] %s228
          %234 = dma.hbm_to_vmem [thread:$0]  %s227, 256, %s229, %s216, 64, 64, 4
        $region28: #{cross_attention_pallas.6} parent=15 // pred_fallthru
          _
      $region16: #{cross_attention_pallas.6} parent=5 // pred_fallthru
        _
      %p235 = scmp.le.s32.totalorder 1, %s18
      %p236 = scmp.lt.s32.totalorder %s18, 3
      %p237 = pnand %p235, %p236
      %p238 = pneg %p237
      // Predicated region
      $region29: #{cross_attention_pallas.6} parent=5 // pred_check
        _
      $region30: #{cross_attention_pallas.6} parent=5 // pred_check_branch
        %240 = sbr.rel (%p237) target = $region32
      $region31: #{cross_attention_pallas.6} parent=5 // pred_region
        %s241 = ssub.s32 %s18, 1
        %s242 = sand.u32 %s52, 1
        %s243 = scalar_lea.sflag [#allocation6], %s242
        %s244 = sand.u32 %s52, 1
        %s245 = smul.addr %s244, 16
        %s246 = scalar_lea.vmem [#allocation5], %s245
        // Predicated region
        $region33: #{cross_attention_pallas.6} parent=31 // pred_check
          %p247 = pneg %p65
        $region34: #{cross_attention_pallas.6} parent=31 // pred_check_branch
          %249 = sbr.rel (%p247) target = $region36
        $region35: #{cross_attention_pallas.6} parent=31 // pred_region
          %250 = dma.done %s243, 256
        $region36: #{cross_attention_pallas.6} parent=31 // pred_fallthru
          _
        %s251 = sand.u32 %s23, 1
        %s252 = scalar_lea.sflag [#allocation9], %s251
        %s253 = sand.u32 %s80, 1
        %s254 = smul.addr %s253, 16
        %s255 = scalar_lea.vmem [#allocation8], %s254
        // Predicated region
        $region37: #{cross_attention_pallas.6} parent=31 // pred_check
          %p256 = pneg %p93
        $region38: #{cross_attention_pallas.6} parent=31 // pred_check_branch
          %258 = sbr.rel (%p256) target = $region40
        $region39: #{cross_attention_pallas.6} parent=31 // pred_region
          %259 = dma.done %s252, 256
        $region40: #{cross_attention_pallas.6} parent=31 // pred_fallthru
          _
        %s260 = sand.u32 %s23, 1
        %s261 = scalar_lea.sflag [#allocation9], %s260
        %s262 = sand.u32 %s108, 1
        %s263 = smul.addr %s262, 16
        %s264 = scalar_lea.vmem [#allocation10], %s263
        // Predicated region
        $region41: #{cross_attention_pallas.6} parent=31 // pred_check
          %p265 = pneg %p121
        $region42: #{cross_attention_pallas.6} parent=31 // pred_check_branch
          %267 = sbr.rel (%p265) target = $region44
        $region43: #{cross_attention_pallas.6} parent=31 // pred_region
          %268 = dma.done %s261, 256
        $region44: #{cross_attention_pallas.6} parent=31 // pred_fallthru
          _
        %s269 = sand.u32 %s52, 1
        %s270 = scalar_lea.sflag [#allocation6], %s269
        %s271 = sand.u32 %s52, 1
        %s272 = smul.addr %s271, 16
        %s273 = scalar_lea.vmem [#allocation5], %s272
        %p274 = pneg %p65
        %p275 = pneg %p62
        %s276 = sand.u32 %s23, 1
        %s277 = scalar_lea.sflag [#allocation9], %s276
        %s278 = sand.u32 %s80, 1
        %s279 = smul.addr %s278, 16
        %s280 = scalar_lea.vmem [#allocation8], %s279
        %p281 = pneg %p93
        %p282 = pneg %p90
        %s283 = sand.u32 %s23, 1
        %s284 = scalar_lea.sflag [#allocation9], %s283
        %s285 = sand.u32 %s108, 1
        %s286 = smul.addr %s285, 16
        %s287 = scalar_lea.vmem [#allocation10], %s286
        %p288 = pneg %p121
        %p289 = pneg %p118
        %p290 = pneg %p149
        %p291 = pneg %p146
        %s292 = sand.u32 %s136, 1
        %s293 = scalar_lea.sflag [#allocation7], %s292
        %s294 = sand.u32 %s136, 1
        %s295 = smul.addr %s294, 16
        %s296 = scalar_lea.vmem [#allocation11], %s295
        %p298 = scmp.eq.s32.totalorder %s30, 0
        // Predicated region
        $region45: #{cross_attention_pallas.6} parent=31 // pred_check
          %p299 = pneg %p298
        $region46: #{cross_attention_pallas.6} parent=31 // pred_check_branch
          %301 = sbr.rel (%p299) target = $region48
        $region47: #{cross_attention_pallas.6} parent=31 // pred_region
          %vm302 = vcmask 7168
          %303 = vst.msk [vmem:[#allocation2] sm:$0xff] %vm302, -inf
          %304 = vst.msk [vmem:[#allocation2 + $0x8] sm:$0xff] %vm302, -inf
          %305 = vst.msk [vmem:[#allocation2 + $0x10] sm:$0xff] %vm302, -inf
          %306 = vst.msk [vmem:[#allocation2 + $0x18] sm:$0xff] %vm302, -inf
          %307 = vst.msk [vmem:[#allocation3] sm:$0xff] %vm302, 0.0
          %308 = vst.msk [vmem:[#allocation3 + $0x8] sm:$0xff] %vm302, 0.0
          %309 = vst.msk [vmem:[#allocation3 + $0x10] sm:$0xff] %vm302, 0.0
          %310 = vst.msk [vmem:[#allocation3 + $0x18] sm:$0xff] %vm302, 0.0
          %vm311 = vcmask 64512
          %312 = vst.msk [vmem:[#allocation4] sm:$0xff] %vm311, 0.0
          %313 = vst.msk [vmem:[#allocation4 + $0x8] sm:$0xff] %vm311, 0.0
          %314 = vst.msk [vmem:[#allocation4 + $0x10] sm:$0xff] %vm311, 0.0
          %315 = vst.msk [vmem:[#allocation4 + $0x18] sm:$0xff] %vm311, 0.0
        $region48: #{cross_attention_pallas.6} parent=31 // pred_fallthru
          _
        %v316 = vld [vmem:[%s246] sm:$0xf]
        %v317 = vld [vmem:[%s246 + $0x4] sm:$0xf]
        %v318 = vld [vmem:[%s246 + $0x8] sm:$0xf]
        %v319 = vld [vmem:[%s246 + $0xc] sm:$0xf]
        %v320 = vld [vmem:[%s255] sm:$0xf]
        %v321 = vld [vmem:[%s255 + $0x4] sm:$0xf]
        %v322 = vld [vmem:[%s255 + $0x8] sm:$0xf]
        %v323 = vld [vmem:[%s255 + $0xc] sm:$0xf]
        %v324 = vld [vmem:[%s264] sm:$0xf]
        %v325 = vld [vmem:[%s264 + $0x4] sm:$0xf]
        %v326 = vld [vmem:[%s264 + $0x8] sm:$0xf]
        %v327 = vld [vmem:[%s264 + $0xc] sm:$0xf]
        %vm328 = vcmask 64512
        %v330 = vsel %vm328, %v316, 0
        %v333 = vsel %vm328, %v320, 0
        %335 = vmatprep.subr.bf16.mxu0 0
        %336 = vmatpush1.bf16.xpose.msra.mxu0 %v333
        %337 = vmatprep.subr.bf16.mxu0 0
        %338 = vmatpush1.bf16.xpose.msra.mxu0 0
        %339 = vmatprep.subr.bf16.mxu0 0
        %340 = vmatpush1.bf16.xpose.msra.mxu0 0
        %341 = vmatprep.subr.bf16.mxu0 0
        %342 = vmatpush1.bf16.xpose.msra.mxu0 0
        %343 = vmatprep.subr.bf16.mxu0 0
        %344 = vmatpush1.bf16.xpose.msra.mxu0 0
        %345 = vmatprep.subr.bf16.mxu0 0
        %346 = vmatpush1.bf16.xpose.msra.mxu0 0
        %347 = vmatprep.subr.bf16.mxu0 0
        %348 = vmatpush1.bf16.xpose.msra.mxu0 0
        %349 = vmatprep.subr.bf16.mxu0 0
        %350 = vmatpush1.bf16.xpose.msra.mxu0 0
        %351 = vmatprep.subr.bf16.mxu0 0
        %352 = vmatpush1.bf16.xpose.msra.mxu0 0
        %353 = vmatprep.subr.bf16.mxu0 0
        %354 = vmatpush1.bf16.xpose.msra.mxu0 0
        %355 = vmatprep.subr.bf16.mxu0 0
        %356 = vmatpush1.bf16.xpose.msra.mxu0 0
        %357 = vmatprep.subr.bf16.mxu0 0
        %358 = vmatpush1.bf16.xpose.msra.mxu0 0
        %359 = vmatprep.subr.bf16.mxu0 0
        %360 = vmatpush1.bf16.xpose.msra.mxu0 0
        %361 = vmatprep.subr.bf16.mxu0 0
        %362 = vmatpush1.bf16.xpose.msra.mxu0 0
        %363 = vmatprep.subr.bf16.mxu0 0
        %364 = vmatpush1.bf16.xpose.msra.mxu0 0
        %365 = vmatprep.subr.bf16.mxu0 0
        %366 = vmatpush1.bf16.xpose.msra.mxu0 0
        %367 = vmatprep.mubr.bf16.mxu0 0
        %368 = vmatmul.mubr.bf16.gmra.mrb[0].mxu0 %v330
        %v369 = vpop.f32.mrb[0].mxu0
        %v370 = vadd.f32 0.0, %v369
        %v371 = vpop.f32.mrb[0].mxu0
        %v372 = vpop.f32.mrb[0].mxu0
        %v373 = vpop.f32.mrb[0].mxu0
        %374 = vdwg.mxu0
        %v376 = vsel %vm328, %v317, 0
        %v379 = vsel %vm328, %v321, 0
        %381 = vmatprep.subr.bf16.mxu0 0
        %382 = vmatpush1.bf16.xpose.msra.mxu0 %v379
        %383 = vmatprep.subr.bf16.mxu0 0
        %384 = vmatpush1.bf16.xpose.msra.mxu0 0
        %385 = vmatprep.subr.bf16.mxu0 0
        %386 = vmatpush1.bf16.xpose.msra.mxu0 0
        %387 = vmatprep.subr.bf16.mxu0 0
        %388 = vmatpush1.bf16.xpose.msra.mxu0 0
        %389 = vmatprep.subr.bf16.mxu0 0
        %390 = vmatpush1.bf16.xpose.msra.mxu0 0
        %391 = vmatprep.subr.bf16.mxu0 0
        %392 = vmatpush1.bf16.xpose.msra.mxu0 0
        %393 = vmatprep.subr.bf16.mxu0 0
        %394 = vmatpush1.bf16.xpose.msra.mxu0 0
        %395 = vmatprep.subr.bf16.mxu0 0
        %396 = vmatpush1.bf16.xpose.msra.mxu0 0
        %397 = vmatprep.subr.bf16.mxu0 0
        %398 = vmatpush1.bf16.xpose.msra.mxu0 0
        %399 = vmatprep.subr.bf16.mxu0 0
        %400 = vmatpush1.bf16.xpose.msra.mxu0 0
        %401 = vmatprep.subr.bf16.mxu0 0
        %402 = vmatpush1.bf16.xpose.msra.mxu0 0
        %403 = vmatprep.subr.bf16.mxu0 0
        %404 = vmatpush1.bf16.xpose.msra.mxu0 0
        %405 = vmatprep.subr.bf16.mxu0 0
        %406 = vmatpush1.bf16.xpose.msra.mxu0 0
        %407 = vmatprep.subr.bf16.mxu0 0
        %408 = vmatpush1.bf16.xpose.msra.mxu0 0
        %409 = vmatprep.subr.bf16.mxu0 0
        %410 = vmatpush1.bf16.xpose.msra.mxu0 0
        %411 = vmatprep.subr.bf16.mxu0 0
        %412 = vmatpush1.bf16.xpose.msra.mxu0 0
        %413 = vmatprep.mubr.bf16.mxu0 0
        %414 = vmatmul.mubr.bf16.gmra.mrb[0].mxu0 %v376
        %v415 = vpop.f32.mrb[0].mxu0
        %v416 = vadd.f32 0.0, %v415
        %v417 = vpop.f32.mrb[0].mxu0
        %v418 = vpop.f32.mrb[0].mxu0
        %v419 = vpop.f32.mrb[0].mxu0
        %420 = vdwg.mxu0
        %v422 = vsel %vm328, %v318, 0
        %v425 = vsel %vm328, %v322, 0
        %427 = vmatprep.subr.bf16.mxu0 0
        %428 = vmatpush1.bf16.xpose.msra.mxu0 %v425
        %429 = vmatprep.subr.bf16.mxu0 0
        %430 = vmatpush1.bf16.xpose.msra.mxu0 0
        %431 = vmatprep.subr.bf16.mxu0 0
        %432 = vmatpush1.bf16.xpose.msra.mxu0 0
        %433 = vmatprep.subr.bf16.mxu0 0
        %434 = vmatpush1.bf16.xpose.msra.mxu0 0
        %435 = vmatprep.subr.bf16.mxu0 0
        %436 = vmatpush1.bf16.xpose.msra.mxu0 0
        %437 = vmatprep.subr.bf16.mxu0 0
        %438 = vmatpush1.bf16.xpose.msra.mxu0 0
        %439 = vmatprep.subr.bf16.mxu0 0
        %440 = vmatpush1.bf16.xpose.msra.mxu0 0
        %441 = vmatprep.subr.bf16.mxu0 0
        %442 = vmatpush1.bf16.xpose.msra.mxu0 0
        %443 = vmatprep.subr.bf16.mxu0 0
        %444 = vmatpush1.bf16.xpose.msra.mxu0 0
        %445 = vmatprep.subr.bf16.mxu0 0
        %446 = vmatpush1.bf16.xpose.msra.mxu0 0
        %447 = vmatprep.subr.bf16.mxu0 0
        %448 = vmatpush1.bf16.xpose.msra.mxu0 0
        %449 = vmatprep.subr.bf16.mxu0 0
        %450 = vmatpush1.bf16.xpose.msra.mxu0 0
        %451 = vmatprep.subr.bf16.mxu0 0
        %452 = vmatpush1.bf16.xpose.msra.mxu0 0
        %453 = vmatprep.subr.bf16.mxu0 0
        %454 = vmatpush1.bf16.xpose.msra.mxu0 0
        %455 = vmatprep.subr.bf16.mxu0 0
        %456 = vmatpush1.bf16.xpose.msra.mxu0 0
        %457 = vmatprep.subr.bf16.mxu0 0
        %458 = vmatpush1.bf16.xpose.msra.mxu0 0
        %459 = vmatprep.mubr.bf16.mxu0 0
        %460 = vmatmul.mubr.bf16.gmra.mrb[0].mxu0 %v422
        %v461 = vpop.f32.mrb[0].mxu0
        %v462 = vadd.f32 0.0, %v461
        %v463 = vpop.f32.mrb[0].mxu0
        %v464 = vpop.f32.mrb[0].mxu0
        %v465 = vpop.f32.mrb[0].mxu0
        %466 = vdwg.mxu0
        %v468 = vsel %vm328, %v319, 0
        %v471 = vsel %vm328, %v323, 0
        %473 = vmatprep.subr.bf16.mxu0 0
        %474 = vmatpush1.bf16.xpose.msra.mxu0 %v471
        %475 = vmatprep.subr.bf16.mxu0 0
        %476 = vmatpush1.bf16.xpose.msra.mxu0 0
        %477 = vmatprep.subr.bf16.mxu0 0
        %478 = vmatpush1.bf16.xpose.msra.mxu0 0
        %479 = vmatprep.subr.bf16.mxu0 0
        %480 = vmatpush1.bf16.xpose.msra.mxu0 0
        %481 = vmatprep.subr.bf16.mxu0 0
        %482 = vmatpush1.bf16.xpose.msra.mxu0 0
        %483 = vmatprep.subr.bf16.mxu0 0
        %484 = vmatpush1.bf16.xpose.msra.mxu0 0
        %485 = vmatprep.subr.bf16.mxu0 0
        %486 = vmatpush1.bf16.xpose.msra.mxu0 0
        %487 = vmatprep.subr.bf16.mxu0 0
        %488 = vmatpush1.bf16.xpose.msra.mxu0 0
        %489 = vmatprep.subr.bf16.mxu0 0
        %490 = vmatpush1.bf16.xpose.msra.mxu0 0
        %491 = vmatprep.subr.bf16.mxu0 0
        %492 = vmatpush1.bf16.xpose.msra.mxu0 0
        %493 = vmatprep.subr.bf16.mxu0 0
        %494 = vmatpush1.bf16.xpose.msra.mxu0 0
        %495 = vmatprep.subr.bf16.mxu0 0
        %496 = vmatpush1.bf16.xpose.msra.mxu0 0
        %497 = vmatprep.subr.bf16.mxu0 0
        %498 = vmatpush1.bf16.xpose.msra.mxu0 0
        %499 = vmatprep.subr.bf16.mxu0 0
        %500 = vmatpush1.bf16.xpose.msra.mxu0 0
        %501 = vmatprep.subr.bf16.mxu0 0
        %502 = vmatpush1.bf16.xpose.msra.mxu0 0
        %503 = vmatprep.subr.bf16.mxu0 0
        %504 = vmatpush1.bf16.xpose.msra.mxu0 0
        %505 = vmatprep.mubr.bf16.mxu0 0
        %506 = vmatmul.mubr.bf16.gmra.mrb[0].mxu0 %v468
        %v507 = vpop.f32.mrb[0].mxu0
        %v508 = vadd.f32 0.0, %v507
        %v509 = vpop.f32.mrb[0].mxu0
        %v510 = vpop.f32.mrb[0].mxu0
        %v511 = vpop.f32.mrb[0].mxu0
        %512 = vdwg.mxu0
        %v513 = vld [vmem:[#allocation2] sm:$0xff]
        %v514 = vld [vmem:[#allocation2 + $0x8] sm:$0xff]
        %v515 = vld [vmem:[#allocation2 + $0x10] sm:$0xff]
        %v516 = vld [vmem:[#allocation2 + $0x18] sm:$0xff]
        %v517 = vsel %vm328, %v370, -inf
        %518 = vmax.xlane.f32.xlu0 %v517
        %v519 = vpop.xlane.xlu0 %518
        %v520 = vsel %vm328, %v416, -inf
        %521 = vmax.xlane.f32.xlu0 %v520
        %v522 = vpop.xlane.xlu0 %521
        %v523 = vsel %vm328, %v462, -inf
        %524 = vmax.xlane.f32.xlu0 %v523
        %v525 = vpop.xlane.xlu0 %524
        %v526 = vsel %vm328, %v508, -inf
        %527 = vmax.xlane.f32.xlu0 %v526
        %v528 = vpop.xlane.xlu0 %527
        %v529 = vmax.f32 %v513, %v519
        %v530 = vmax.f32 %v514, %v522
        %v531 = vmax.f32 %v515, %v525
        %v532 = vmax.f32 %v516, %v528
        %v533 = vsub.f32 %v513, %v529
        %v534 = vsub.f32 %v514, %v530
        %v535 = vsub.f32 %v515, %v531
        %v536 = vsub.f32 %v516, %v532
        %v537 = vmul.f32 %v533, 1.442695
        %v538 = vpow.pop %v537
        %v539 = vmul.f32 %v534, 1.442695
        %v540 = vpow.pop %v539
        %v541 = vmul.f32 %v535, 1.442695
        %v542 = vpow.pop %v541
        %v543 = vmul.f32 %v536, 1.442695
        %v544 = vpow.pop %v543
        %546 = vset.pattern.permute.xlu0 0
        %547 = vperm.xlu0 %546, %v529
        %v548 = vpop.permute.xlu0 %547
        %551 = vset.pattern.permute.xlu0 0
        %552 = vperm.xlu0 %551, %v530
        %v553 = vpop.permute.xlu0 %552
        %556 = vset.pattern.permute.xlu0 0
        %557 = vperm.xlu0 %556, %v531
        %v558 = vpop.permute.xlu0 %557
        %561 = vset.pattern.permute.xlu0 0
        %562 = vperm.xlu0 %561, %v532
        %v563 = vpop.permute.xlu0 %562
        %v565 = vsub.f32 %v370, %v548
        %v566 = vsub.f32 %v416, %v553
        %v567 = vsub.f32 %v462, %v558
        %v568 = vsub.f32 %v508, %v563
        %v569 = vmul.f32 %v565, 1.442695
        %v570 = vpow.pop %v569
        %v571 = vmul.f32 %v566, 1.442695
        %v572 = vpow.pop %v571
        %v573 = vmul.f32 %v567, 1.442695
        %v574 = vpow.pop %v573
        %v575 = vmul.f32 %v568, 1.442695
        %v576 = vpow.pop %v575
        %v577 = vld [vmem:[#allocation3] sm:$0xff]
        %v578 = vld [vmem:[#allocation3 + $0x8] sm:$0xff]
        %v579 = vld [vmem:[#allocation3 + $0x10] sm:$0xff]
        %v580 = vld [vmem:[#allocation3 + $0x18] sm:$0xff]
        %v581 = vmul.f32 %v538, %v577
        %v582 = vmul.f32 %v540, %v578
        %v583 = vmul.f32 %v542, %v579
        %v584 = vmul.f32 %v544, %v580
        %v585 = vsel %vm328, %v570, 0.0
        %586 = vadd.xlane.f32.xlu0 %v585
        %v587 = vpop.xlane.xlu0 %586
        %v588 = vsel %vm328, %v572, 0.0
        %589 = vadd.xlane.f32.xlu0 %v588
        %v590 = vpop.xlane.xlu0 %589
        %v591 = vsel %vm328, %v574, 0.0
        %592 = vadd.xlane.f32.xlu0 %v591
        %v593 = vpop.xlane.xlu0 %592
        %v594 = vsel %vm328, %v576, 0.0
        %595 = vadd.xlane.f32.xlu0 %v594
        %v596 = vpop.xlane.xlu0 %595
        %v597 = vadd.f32 %v581, %v587
        %v598 = vadd.f32 %v582, %v590
        %v599 = vadd.f32 %v583, %v593
        %v600 = vadd.f32 %v584, %v596
        %vm601 = vcmask 7168
        %602 = vst.msk [vmem:[#allocation3] sm:$0xff] %vm601, %v597
        %603 = vst.msk [vmem:[#allocation3 + $0x8] sm:$0xff] %vm601, %v598
        %604 = vst.msk [vmem:[#allocation3 + $0x10] sm:$0xff] %vm601, %v599
        %605 = vst.msk [vmem:[#allocation3 + $0x18] sm:$0xff] %vm601, %v600
        %v606 = vld [vmem:[#allocation4] sm:$0xff]
        %v607 = vld [vmem:[#allocation4 + $0x8] sm:$0xff]
        %v608 = vld [vmem:[#allocation4 + $0x10] sm:$0xff]
        %v609 = vld [vmem:[#allocation4 + $0x18] sm:$0xff]
        %611 = vset.pattern.permute.xlu0 0
        %612 = vperm.xlu0 %611, %v538
        %v613 = vpop.permute.xlu0 %612
        %616 = vset.pattern.permute.xlu0 0
        %617 = vperm.xlu0 %616, %v540
        %v618 = vpop.permute.xlu0 %617
        %621 = vset.pattern.permute.xlu0 0
        %622 = vperm.xlu0 %621, %v542
        %v623 = vpop.permute.xlu0 %622
        %626 = vset.pattern.permute.xlu0 0
        %627 = vperm.xlu0 %626, %v544
        %v628 = vpop.permute.xlu0 %627
        %v630 = vmul.f32 %v613, %v606
        %v631 = vmul.f32 %v618, %v607
        %v632 = vmul.f32 %v623, %v608
        %v633 = vmul.f32 %v628, %v609
        %v634 = vpack.c.bf16 %v570, %v570
        %v635 = vpack.c.bf16 %v572, %v572
        %v636 = vpack.c.bf16 %v574, %v574
        %v637 = vpack.c.bf16 %v576, %v576
        %v639 = vsel %vm328, %v634, 0
        %vm641 = vcmask 1043456
        %v643 = vsel %vm641, %v324, 0
        %645 = vmatprep.subr.bf16.mxu0 0
        %646 = vmatpush1.bf16.msra.mxu0 %v643
        %647 = vmatprep.subr.bf16.mxu0 0
        %648 = vmatpush1.bf16.msra.mxu0 0
        %649 = vmatprep.subr.bf16.mxu0 0
        %650 = vmatpush1.bf16.msra.mxu0 0
        %651 = vmatprep.subr.bf16.mxu0 0
        %652 = vmatpush1.bf16.msra.mxu0 0
        %653 = vmatprep.subr.bf16.mxu0 0
        %654 = vmatpush1.bf16.msra.mxu0 0
        %655 = vmatprep.subr.bf16.mxu0 0
        %656 = vmatpush1.bf16.msra.mxu0 0
        %657 = vmatprep.subr.bf16.mxu0 0
        %658 = vmatpush1.bf16.msra.mxu0 0
        %659 = vmatprep.subr.bf16.mxu0 0
        %660 = vmatpush1.bf16.msra.mxu0 0
        %661 = vmatprep.subr.bf16.mxu0 0
        %662 = vmatpush1.bf16.msra.mxu0 0
        %663 = vmatprep.subr.bf16.mxu0 0
        %664 = vmatpush1.bf16.msra.mxu0 0
        %665 = vmatprep.subr.bf16.mxu0 0
        %666 = vmatpush1.bf16.msra.mxu0 0
        %667 = vmatprep.subr.bf16.mxu0 0
        %668 = vmatpush1.bf16.msra.mxu0 0
        %669 = vmatprep.subr.bf16.mxu0 0
        %670 = vmatpush1.bf16.msra.mxu0 0
        %671 = vmatprep.subr.bf16.mxu0 0
        %672 = vmatpush1.bf16.msra.mxu0 0
        %673 = vmatprep.subr.bf16.mxu0 0
        %674 = vmatpush1.bf16.msra.mxu0 0
        %675 = vmatprep.subr.bf16.mxu0 0
        %676 = vmatpush1.bf16.msra.mxu0 0
        %677 = vmatprep.mubr.bf16.mxu0 0
        %678 = vmatmul.mubr.bf16.gmra.mrb[0].mxu0 %v639
        %v679 = vpop.f32.mrb[0].mxu0
        %v680 = vadd.f32 0.0, %v679
        %v681 = vpop.f32.mrb[0].mxu0
        %v682 = vpop.f32.mrb[0].mxu0
        %v683 = vpop.f32.mrb[0].mxu0
        %684 = vdwg.mxu0
        %v686 = vsel %vm328, %v635, 0
        %v689 = vsel %vm641, %v325, 0
        %691 = vmatprep.subr.bf16.mxu0 0
        %692 = vmatpush1.bf16.msra.mxu0 %v689
        %693 = vmatprep.subr.bf16.mxu0 0
        %694 = vmatpush1.bf16.msra.mxu0 0
        %695 = vmatprep.subr.bf16.mxu0 0
        %696 = vmatpush1.bf16.msra.mxu0 0
        %697 = vmatprep.subr.bf16.mxu0 0
        %698 = vmatpush1.bf16.msra.mxu0 0
        %699 = vmatprep.subr.bf16.mxu0 0
        %700 = vmatpush1.bf16.msra.mxu0 0
        %701 = vmatprep.subr.bf16.mxu0 0
        %702 = vmatpush1.bf16.msra.mxu0 0
        %703 = vmatprep.subr.bf16.mxu0 0
        %704 = vmatpush1.bf16.msra.mxu0 0
        %705 = vmatprep.subr.bf16.mxu0 0
        %706 = vmatpush1.bf16.msra.mxu0 0
        %707 = vmatprep.subr.bf16.mxu0 0
        %708 = vmatpush1.bf16.msra.mxu0 0
        %709 = vmatprep.subr.bf16.mxu0 0
        %710 = vmatpush1.bf16.msra.mxu0 0
        %711 = vmatprep.subr.bf16.mxu0 0
        %712 = vmatpush1.bf16.msra.mxu0 0
        %713 = vmatprep.subr.bf16.mxu0 0
        %714 = vmatpush1.bf16.msra.mxu0 0
        %715 = vmatprep.subr.bf16.mxu0 0
        %716 = vmatpush1.bf16.msra.mxu0 0
        %717 = vmatprep.subr.bf16.mxu0 0
        %718 = vmatpush1.bf16.msra.mxu0 0
        %719 = vmatprep.subr.bf16.mxu0 0
        %720 = vmatpush1.bf16.msra.mxu0 0
        %721 = vmatprep.subr.bf16.mxu0 0
        %722 = vmatpush1.bf16.msra.mxu0 0
        %723 = vmatprep.mubr.bf16.mxu0 0
        %724 = vmatmul.mubr.bf16.gmra.mrb[0].mxu0 %v686
        %v725 = vpop.f32.mrb[0].mxu0
        %v726 = vadd.f32 0.0, %v725
        %v727 = vpop.f32.mrb[0].mxu0
        %v728 = vpop.f32.mrb[0].mxu0
        %v729 = vpop.f32.mrb[0].mxu0
        %730 = vdwg.mxu0
        %v732 = vsel %vm328, %v636, 0
        %v735 = vsel %vm641, %v326, 0
        %737 = vmatprep.subr.bf16.mxu0 0
        %738 = vmatpush1.bf16.msra.mxu0 %v735
        %739 = vmatprep.subr.bf16.mxu0 0
        %740 = vmatpush1.bf16.msra.mxu0 0
        %741 = vmatprep.subr.bf16.mxu0 0
        %742 = vmatpush1.bf16.msra.mxu0 0
        %743 = vmatprep.subr.bf16.mxu0 0
        %744 = vmatpush1.bf16.msra.mxu0 0
        %745 = vmatprep.subr.bf16.mxu0 0
        %746 = vmatpush1.bf16.msra.mxu0 0
        %747 = vmatprep.subr.bf16.mxu0 0
        %748 = vmatpush1.bf16.msra.mxu0 0
        %749 = vmatprep.subr.bf16.mxu0 0
        %750 = vmatpush1.bf16.msra.mxu0 0
        %751 = vmatprep.subr.bf16.mxu0 0
        %752 = vmatpush1.bf16.msra.mxu0 0
        %753 = vmatprep.subr.bf16.mxu0 0
        %754 = vmatpush1.bf16.msra.mxu0 0
        %755 = vmatprep.subr.bf16.mxu0 0
        %756 = vmatpush1.bf16.msra.mxu0 0
        %757 = vmatprep.subr.bf16.mxu0 0
        %758 = vmatpush1.bf16.msra.mxu0 0
        %759 = vmatprep.subr.bf16.mxu0 0
        %760 = vmatpush1.bf16.msra.mxu0 0
        %761 = vmatprep.subr.bf16.mxu0 0
        %762 = vmatpush1.bf16.msra.mxu0 0
        %763 = vmatprep.subr.bf16.mxu0 0
        %764 = vmatpush1.bf16.msra.mxu0 0
        %765 = vmatprep.subr.bf16.mxu0 0
        %766 = vmatpush1.bf16.msra.mxu0 0
        %767 = vmatprep.subr.bf16.mxu0 0
        %768 = vmatpush1.bf16.msra.mxu0 0
        %769 = vmatprep.mubr.bf16.mxu0 0
        %770 = vmatmul.mubr.bf16.gmra.mrb[0].mxu0 %v732
        %v771 = vpop.f32.mrb[0].mxu0
        %v772 = vadd.f32 0.0, %v771
        %v773 = vpop.f32.mrb[0].mxu0
        %v774 = vpop.f32.mrb[0].mxu0
        %v775 = vpop.f32.mrb[0].mxu0
        %776 = vdwg.mxu0
        %v778 = vsel %vm328, %v637, 0
        %v781 = vsel %vm641, %v327, 0
        %783 = vmatprep.subr.bf16.mxu0 0
        %784 = vmatpush1.bf16.msra.mxu0 %v781
        %785 = vmatprep.subr.bf16.mxu0 0
        %786 = vmatpush1.bf16.msra.mxu0 0
        %787 = vmatprep.subr.bf16.mxu0 0
        %788 = vmatpush1.bf16.msra.mxu0 0
        %789 = vmatprep.subr.bf16.mxu0 0
        %790 = vmatpush1.bf16.msra.mxu0 0
        %791 = vmatprep.subr.bf16.mxu0 0
        %792 = vmatpush1.bf16.msra.mxu0 0
        %793 = vmatprep.subr.bf16.mxu0 0
        %794 = vmatpush1.bf16.msra.mxu0 0
        %795 = vmatprep.subr.bf16.mxu0 0
        %796 = vmatpush1.bf16.msra.mxu0 0
        %797 = vmatprep.subr.bf16.mxu0 0
        %798 = vmatpush1.bf16.msra.mxu0 0
        %799 = vmatprep.subr.bf16.mxu0 0
        %800 = vmatpush1.bf16.msra.mxu0 0
        %801 = vmatprep.subr.bf16.mxu0 0
        %802 = vmatpush1.bf16.msra.mxu0 0
        %803 = vmatprep.subr.bf16.mxu0 0
        %804 = vmatpush1.bf16.msra.mxu0 0
        %805 = vmatprep.subr.bf16.mxu0 0
        %806 = vmatpush1.bf16.msra.mxu0 0
        %807 = vmatprep.subr.bf16.mxu0 0
        %808 = vmatpush1.bf16.msra.mxu0 0
        %809 = vmatprep.subr.bf16.mxu0 0
        %810 = vmatpush1.bf16.msra.mxu0 0
        %811 = vmatprep.subr.bf16.mxu0 0
        %812 = vmatpush1.bf16.msra.mxu0 0
        %813 = vmatprep.subr.bf16.mxu0 0
        %814 = vmatpush1.bf16.msra.mxu0 0
        %815 = vmatprep.mubr.bf16.mxu0 0
        %816 = vmatmul.mubr.bf16.gmra.mrb[0].mxu0 %v778
        %v817 = vpop.f32.mrb[0].mxu0
        %v818 = vadd.f32 0.0, %v817
        %v819 = vpop.f32.mrb[0].mxu0
        %v820 = vpop.f32.mrb[0].mxu0
        %v821 = vpop.f32.mrb[0].mxu0
        %822 = vdwg.mxu0
        %v823 = vadd.f32 %v630, %v680
        %v824 = vadd.f32 %v631, %v726
        %v825 = vadd.f32 %v632, %v772
        %v826 = vadd.f32 %v633, %v818
        %827 = vst.msk [vmem:[#allocation4] sm:$0xff] %vm328, %v823
        %828 = vst.msk [vmem:[#allocation4 + $0x8] sm:$0xff] %vm328, %v824
        %829 = vst.msk [vmem:[#allocation4 + $0x10] sm:$0xff] %vm328, %v825
        %830 = vst.msk [vmem:[#allocation4 + $0x18] sm:$0xff] %vm328, %v826
        %831 = vst.msk [vmem:[#allocation2] sm:$0xff] %vm601, %v529
        %832 = vst.msk [vmem:[#allocation2 + $0x8] sm:$0xff] %vm601, %v530
        %833 = vst.msk [vmem:[#allocation2 + $0x10] sm:$0xff] %vm601, %v531
        %834 = vst.msk [vmem:[#allocation2 + $0x18] sm:$0xff] %vm601, %v532
        // Predicated region
        $region49: #{cross_attention_pallas.6} parent=31 // pred_check
          %p835 = pneg %p298
        $region50: #{cross_attention_pallas.6} parent=31 // pred_check_branch
          %837 = sbr.rel (%p835) target = $region52
        $region51: #{cross_attention_pallas.6} parent=31 // pred_region
          %v838 = vld [vmem:[#allocation4] sm:$0xff]
          %v839 = vld [vmem:[#allocation4 + $0x8] sm:$0xff]
          %v840 = vld [vmem:[#allocation4 + $0x10] sm:$0xff]
          %v841 = vld [vmem:[#allocation4 + $0x18] sm:$0xff]
          %v842 = vld [vmem:[#allocation3] sm:$0xff]
          %v843 = vld [vmem:[#allocation3 + $0x8] sm:$0xff]
          %v844 = vld [vmem:[#allocation3 + $0x10] sm:$0xff]
          %v845 = vld [vmem:[#allocation3 + $0x18] sm:$0xff]
          %v846 = vrcp.pop %v842
          %v847 = vrcp.pop %v843
          %v848 = vrcp.pop %v844
          %v849 = vrcp.pop %v845
          %851 = vset.pattern.permute.xlu0 0
          %852 = vperm.xlu0 %851, %v846
          %v853 = vpop.permute.xlu0 %852
          %856 = vset.pattern.permute.xlu0 0
          %857 = vperm.xlu0 %856, %v847
          %v858 = vpop.permute.xlu0 %857
          %861 = vset.pattern.permute.xlu0 0
          %862 = vperm.xlu0 %861, %v848
          %v863 = vpop.permute.xlu0 %862
          %866 = vset.pattern.permute.xlu0 0
          %867 = vperm.xlu0 %866, %v849
          %v868 = vpop.permute.xlu0 %867
          %v870 = vmul.f32 %v838, %v853
          %v871 = vmul.f32 %v839, %v858
          %v872 = vmul.f32 %v840, %v863
          %v873 = vmul.f32 %v841, %v868
          %v874 = vpack.c.bf16 %v870, %v870
          %v875 = vpack.c.bf16 %v871, %v871
          %v876 = vpack.c.bf16 %v872, %v872
          %v877 = vpack.c.bf16 %v873, %v873
          %vm878 = vcmask 60416
          %879 = vst.msk [vmem:[%s296] sm:$0xf] %vm878, %v874
          %880 = vst.msk [vmem:[%s296 + $0x4] sm:$0xf] %vm878, %v875
          %881 = vst.msk [vmem:[%s296 + $0x8] sm:$0xf] %vm878, %v876
          %882 = vst.msk [vmem:[%s296 + $0xc] sm:$0xf] %vm878, %v877
        $region52: #{cross_attention_pallas.6} parent=31 // pred_fallthru
          _
        %s883 = sand.u32 %s136, 1
        %s884 = scalar_lea.sflag [#allocation7], %s883
        %s885 = sand.u32 %s136, 1
        %s886 = smul.addr %s885, 16
        %s887 = scalar_lea.vmem [#allocation11], %s886
        // Predicated region
        $region53: #{cross_attention_pallas.6} parent=31 // pred_check
          %p888 = pneg %p146
        $region54: #{cross_attention_pallas.6} parent=31 // pred_check_branch
          %890 = sbr.rel (%p888) target = $region56
        $region55: #{cross_attention_pallas.6} parent=31 // pred_region
          %s892 = ssub.s32 256, 256
          %893 = vsyncadd %s884, %s892
          %s894 = smul.addr %s28, 4
          %s895 = sadd.s32 %s29, %s894
          %s896 = smul.addr %s895, 64
          %s897 = scalar_lea.hbm %s3, %s896
          %s898 = sshll.u32 %s887, 4
          %s899 = int_to_ptr.vmem [resolvable:$true] %s898
          %904 = dma.vmem_to_hbm [thread:$0]  %s899, 256, %s897, %s884, 64, 64, 4
        $region56: #{cross_attention_pallas.6} parent=31 // pred_fallthru
          _
      $region32: #{cross_attention_pallas.6} parent=5 // pred_fallthru
        _
      %p905 = scmp.le.s32.totalorder 2, %s18
      // Predicated region
      $region57: #{cross_attention_pallas.6} parent=5 // pred_check
        %p906 = pneg %p905
      $region58: #{cross_attention_pallas.6} parent=5 // pred_check_branch
        %908 = sbr.rel (%p906) target = $region60
      $region59: #{cross_attention_pallas.6} parent=5 // pred_region
        %s909 = ssub.s32 %s18, 2
        // Predicated region
        $region61: #{cross_attention_pallas.6} parent=59 // pred_check
          %p910 = pneg %p152
        $region62: #{cross_attention_pallas.6} parent=59 // pred_check_branch
          %912 = sbr.rel (%p910) target = $region64
        $region63: #{cross_attention_pallas.6} parent=59 // pred_region
          %s913 = sand.u32 %s137, 1
          %s914 = scalar_lea.sflag [#allocation7], %s913
          %s915 = sand.u32 %s137, 1
          %s916 = smul.addr %s915, 16
          %s917 = scalar_lea.vmem [#allocation11], %s916
          %918 = dma.done %s914, 256
        $region64: #{cross_attention_pallas.6} parent=59 // pred_fallthru
          _
      $region60: #{cross_attention_pallas.6} parent=5 // pred_fallthru
        _
    $region6: #{cross_attention_pallas.6} parent=1 // loop_footer
      %s22 = sadd.s32 1, %s18
    $region7: #{cross_attention_pallas.6} parent=1 // loop_footer_branch
      %17 = sbr.rel target = $region3
    $region8: #{cross_attention_pallas.6} parent=1 // loop_exit
      _
    %919 = vsyncpa [#allocation6], 1
    %s920 = scalar_lea.sflag [#allocation6], 1
    %921 = vsyncpa %s920, 1
    %922 = vsyncpa [#allocation9], 1
    %s923 = scalar_lea.sflag [#allocation9], 1
    %924 = vsyncpa %s923, 1
    %925 = vsyncpa [#allocation7], 1
    %s926 = scalar_lea.sflag [#allocation7], 1
    %927 = vsyncpa %s926, 1

// kernel: cross_attention_pallas.7
$region0: #{cross_attention_pallas.7}
  #allocation0 [shape = 'u32[]', space=smem, size = 0x4, offset = 0x4, fixed_abs, tag = 'smem constant byte address 0x4 - core index']
  #allocation1 [shape = 'u32[144,128]{1,0:T(1,128)}', space=vmem, size = 0x12000, scoped, tag = 'internal scratch']
  %s0 = inlined_call_operand.hbm [shape: bf16[16,32], index: 0, kind: input, shape index: {}]
  %s1 = inlined_call_operand.hbm [shape: bf16[32,16], index: 1, kind: input, shape index: {}]
  %s2 = inlined_call_operand.hbm [shape: f32[1,16], index: 2, kind: input, shape index: {}]
  %s3 = inlined_call_operand.hbm [shape: f32[16,16], index: 3, kind: output, shape index: {}]
  %s4 = sld [smem:[#allocation0]]
  $region57: #{cross_attention_pallas.7} parent=0
    _
  %s6 = ssub.s32 1, %s4
  %s7 = scalar_select 0, %s6, %s4
  $region1: #{cross_attention_pallas.7} parent=0
    #allocation2 [shape = 'u8[4096]{0}', space=vmem, size = 0x1000, scoped, tag = 'input window, operand 0']
    #allocation3 [shape = 's32[2]{0}', space=sflag, size = 0x8, scoped, tag = 'scoped memory for cross_attention_pallas.7']
    #allocation4 [shape = 's32[2]{0}', space=sflag, size = 0x8, scoped, tag = 'scoped memory for cross_attention_pallas.7']
    #allocation5 [shape = 'u8[8192]{0}', space=vmem, size = 0x2000, scoped, tag = 'input window, operand 1, single buffered']
    #allocation6 [shape = 's32[1]{0}', space=sflag, size = 0x4, scoped, tag = 'scoped memory for cross_attention_pallas.7']
    #allocation7 [shape = 'u8[512]{0}', space=vmem, size = 0x400, scoped, tag = 'input window, operand 2, single buffered']
    #allocation8 [shape = 'u8[8192]{0}', space=vmem, size = 0x2000, scoped, tag = 'output window, operand 0']
    %8 = vsyncpa [#allocation3], 0
    %s9 = scalar_lea.sflag [#allocation3], 1
    %10 = vsyncpa %s9, 0
    %11 = vsyncpa [#allocation6], 0
    %12 = vsyncpa [#allocation4], 0
    %s13 = scalar_lea.sflag [#allocation4], 1
    %14 = vsyncpa %s13, 0
    loop: start=0, step=1, limit=4
    $region2: #{cross_attention_pallas.7} parent=1 // loop_pre_header
      _
    $region3: #{cross_attention_pallas.7} parent=1 // loop_header
      %s16 = sphi 0, %s20
      %p17 = scmp.ge.s32.totalorder %s16, 4
      %s23 = sphi 0, %s35
      %s24 = sphi 0, %s31
      %s25 = sphi 0, %s23
      %s26 = sphi 0, %s24
      %s27 = sphi 0, %s25
      %s28 = sphi 0, %s26
      %s38 = sphi 0, %s40
      %s41 = sphi 0, %s38
      %s42 = sphi 0, %s41
      %s58 = sphi 0, %s42
      %s64 = sphi 0, %s66
      %s67 = sphi 0, %s64
      %s68 = sphi 0, %s67
      %s84 = sphi 0, %s68
      %s90 = sphi 0, %s92
      %s93 = sphi 0, %s90
      %s94 = sphi 0, %s93
      %s110 = sphi 0, %s94
      %s118 = sphi 0, %s120
      %s121 = sphi 0, %s118
      %s122 = sphi 0, %s121
      %s138 = sphi 0, %s122
    $region4: #{cross_attention_pallas.7} parent=1 // loop_header_branch
      %19 = sbr.rel (%p17) target = $region8
    $region5: #{cross_attention_pallas.7} parent=1 // loop_body
      %s21 = ssub.s32 %s16, 1
      %s22 = ssub.s32 %s16, 2
      %s29 = sadd.s32 1, %s24
      %p30 = scmp.ge.s32.totalorder %s29, 2
      %s31 = scalar_select %p30, 0, %s29
      %s32 = sadd.s32 1, %s23
      %s33 = scalar_select %p30, %s32, %s23
      %p34 = scmp.ge.s32.totalorder %s33, 1
      %s35 = scalar_select %p34, 0, %s33
      %s36 = ssub.s32 %s24, %s31
      %p37 = scmp.eq.s32.totalorder %s36, 0
      %s39 = sadd.s32 %s38, 1
      %s40 = scalar_select %p37, %s38, %s39
      %p43 = pneg %p37
      %p44 = scmp.eq.s32.totalorder %s16, 1
      %p45 = por %p43, %p44
      %p46 = scmp.ne.s32.totalorder %s38, %s41
      %p47 = scmp.eq.s32.totalorder %s16, 0
      %p48 = por %p46, %p47
      %p49 = scmp.ne.s32.totalorder %s38, %s41
      %p50 = scmp.eq.s32.totalorder %s21, 1
      %p51 = por %p49, %p50
      %p52 = scmp.ne.s32.totalorder %s41, %s42
      %p53 = scmp.eq.s32.totalorder %s21, 0
      %p54 = por %p52, %p53
      %p55 = scmp.ne.s32.totalorder %s41, %s42
      %p56 = scmp.eq.s32.totalorder %s22, 1
      %p57 = por %p55, %p56
      %p59 = scmp.ne.s32.totalorder %s42, %s58
      %p60 = scmp.eq.s32.totalorder %s22, 0
      %p61 = por %p59, %p60
      %s62 = ssub.s32 %s23, %s35
      %p63 = scmp.eq.s32.totalorder %s62, 0
      %s65 = sadd.s32 %s64, 1
      %s66 = scalar_select %p63, %s64, %s65
      %p69 = pneg %p63
      %p70 = scmp.eq.s32.totalorder %s16, 1
      %p71 = por %p69, %p70
      %p72 = scmp.ne.s32.totalorder %s64, %s67
      %p73 = scmp.eq.s32.totalorder %s16, 0
      %p74 = por %p72, %p73
      %p75 = scmp.ne.s32.totalorder %s64, %s67
      %p76 = scmp.eq.s32.totalorder %s21, 1
      %p77 = por %p75, %p76
      %p78 = scmp.ne.s32.totalorder %s67, %s68
      %p79 = scmp.eq.s32.totalorder %s21, 0
      %p80 = por %p78, %p79
      %p81 = scmp.ne.s32.totalorder %s67, %s68
      %p82 = scmp.eq.s32.totalorder %s22, 1
      %p83 = por %p81, %p82
      %p85 = scmp.ne.s32.totalorder %s68, %s84
      %p86 = scmp.eq.s32.totalorder %s22, 0
      %p87 = por %p85, %p86
      %s88 = ssub.s32 %s23, %s35
      %p89 = scmp.eq.s32.totalorder %s88, 0
      %s91 = sadd.s32 %s90, 1
      %s92 = scalar_select %p89, %s90, %s91
      %p95 = pneg %p89
      %p96 = scmp.eq.s32.totalorder %s16, 1
      %p97 = por %p95, %p96
      %p98 = scmp.ne.s32.totalorder %s90, %s93
      %p99 = scmp.eq.s32.totalorder %s16, 0
      %p100 = por %p98, %p99
      %p101 = scmp.ne.s32.totalorder %s90, %s93
      %p102 = scmp.eq.s32.totalorder %s21, 1
      %p103 = por %p101, %p102
      %p104 = scmp.ne.s32.totalorder %s93, %s94
      %p105 = scmp.eq.s32.totalorder %s21, 0
      %p106 = por %p104, %p105
      %p107 = scmp.ne.s32.totalorder %s93, %s94
      %p108 = scmp.eq.s32.totalorder %s22, 1
      %p109 = por %p107, %p108
      %p111 = scmp.ne.s32.totalorder %s94, %s110
      %p112 = scmp.eq.s32.totalorder %s22, 0
      %p113 = por %p111, %p112
      %s114 = ssub.s32 %s24, %s31
      %s115 = ssub.s32 %s23, %s35
      %s116 = sor.u32 %s114, %s115
      %p117 = scmp.eq.s32.totalorder %s116, 0
      %s119 = sadd.s32 %s118, 1
      %s120 = scalar_select %p117, %s118, %s119
      %p123 = pneg %p117
      %p124 = scmp.eq.s32.totalorder %s16, 1
      %p125 = por %p123, %p124
      %p126 = scmp.ne.s32.totalorder %s118, %s121
      %p127 = scmp.eq.s32.totalorder %s16, 0
      %p128 = por %p126, %p127
      %p129 = scmp.ne.s32.totalorder %s118, %s121
      %p130 = scmp.eq.s32.totalorder %s21, 1
      %p131 = por %p129, %p130
      %p132 = scmp.ne.s32.totalorder %s121, %s122
      %p133 = scmp.eq.s32.totalorder %s21, 0
      %p134 = por %p132, %p133
      %p135 = scmp.ne.s32.totalorder %s121, %s122
      %p136 = scmp.eq.s32.totalorder %s22, 1
      %p137 = por %p135, %p136
      %p139 = scmp.ne.s32.totalorder %s122, %s138
      %p140 = scmp.eq.s32.totalorder %s22, 0
      %p141 = por %p139, %p140
      %p142 = scmp.le.s32.totalorder 1, %s16
      %p143 = scmp.lt.s32.totalorder %s16, 3
      %p144 = pnand %p142, %p143
      %p145 = pneg %p144
      // Predicated region
      $region9: #{cross_attention_pallas.7} parent=5 // pred_check
        _
      $region10: #{cross_attention_pallas.7} parent=5 // pred_check_branch
        %147 = sbr.rel (%p144) target = $region12
      $region11: #{cross_attention_pallas.7} parent=5 // pred_region
        %s148 = ssub.s32 %s16, 1
        // Predicated region
        $region13: #{cross_attention_pallas.7} parent=11 // pred_check
          %p149 = pneg %p80
        $region14: #{cross_attention_pallas.7} parent=11 // pred_check_branch
          %151 = sbr.rel (%p149) target = $region16
        $region15: #{cross_attention_pallas.7} parent=11 // pred_region
          %s153 = ssub.s32 256, 256
          %154 = vsyncadd [#allocation6], %s153
          %s155 = smul.addr %s25, 64
          %s156 = scalar_lea.hbm %s1, %s155
          %s157 = sshll.u32 [#allocation5], 4
          %s158 = int_to_ptr.vmem [resolvable:$true] %s157
          %163 = dma.hbm_to_vmem [thread:$0]  %s156, 256, %s158, [#allocation6], 64, 64, 4
        $region16: #{cross_attention_pallas.7} parent=11 // pred_fallthru
          _
        // Predicated region
        $region17: #{cross_attention_pallas.7} parent=11 // pred_check
          %p164 = pneg %p106
        $region18: #{cross_attention_pallas.7} parent=11 // pred_check_branch
          %166 = sbr.rel (%p164) target = $region20
        $region19: #{cross_attention_pallas.7} parent=11 // pred_region
          %s168 = ssub.s32 16, 16
          %169 = vsyncadd [#allocation6], %s168
          %s170 = smul.addr %s25, 16
          %s171 = scalar_lea.hbm %s2, %s170
          %s173 = sshll.u32 [#allocation7], 4
          %s174 = int_to_ptr.vmem [resolvable:$true] %s173
          %176 = dma.hbm_to_vmem [thread:$0]  %s171, 16, %s174, [#allocation6]
        $region20: #{cross_attention_pallas.7} parent=11 // pred_fallthru
          _
      $region12: #{cross_attention_pallas.7} parent=5 // pred_fallthru
        _
      %p177 = scmp.lt.s32.totalorder %s16, 2
      // Predicated region
      $region21: #{cross_attention_pallas.7} parent=5 // pred_check
        %p178 = pneg %p177
      $region22: #{cross_attention_pallas.7} parent=5 // pred_check_branch
        %180 = sbr.rel (%p178) target = $region24
      $region23: #{cross_attention_pallas.7} parent=5 // pred_region
        // Predicated region
        $region25: #{cross_attention_pallas.7} parent=23 // pred_check
          %p181 = pneg %p48
        $region26: #{cross_attention_pallas.7} parent=23 // pred_check_branch
          %183 = sbr.rel (%p181) target = $region28
        $region27: #{cross_attention_pallas.7} parent=23 // pred_region
          %s184 = sand.u32 %s38, 1
          %s185 = scalar_lea.sflag [#allocation3], %s184
          %s186 = sand.u32 %s38, 1
          %s187 = smul.addr %s186, 4
          %s188 = scalar_lea.vmem [#allocation2], %s187
          %s190 = ssub.s32 64, 64
          %191 = vsyncadd %s185, %s190
          %s192 = smul.addr %s24, 64
          %s193 = scalar_lea.hbm %s0, %s192
          %s195 = sshll.u32 %s188, 4
          %s196 = int_to_ptr.vmem [resolvable:$true] %s195
          %198 = dma.hbm_to_vmem [thread:$0]  %s193, 64, %s196, %s185
        $region28: #{cross_attention_pallas.7} parent=23 // pred_fallthru
          _
      $region24: #{cross_attention_pallas.7} parent=5 // pred_fallthru
        _
      %p199 = scmp.le.s32.totalorder 1, %s16
      %p200 = scmp.lt.s32.totalorder %s16, 3
      %p201 = pnand %p199, %p200
      %p202 = pneg %p201
      // Predicated region
      $region29: #{cross_attention_pallas.7} parent=5 // pred_check
        _
      $region30: #{cross_attention_pallas.7} parent=5 // pred_check_branch
        %204 = sbr.rel (%p201) target = $region32
      $region31: #{cross_attention_pallas.7} parent=5 // pred_region
        %s205 = ssub.s32 %s16, 1
        %s206 = sand.u32 %s41, 1
        %s207 = scalar_lea.sflag [#allocation3], %s206
        %s208 = sand.u32 %s41, 1
        %s209 = smul.addr %s208, 4
        %s210 = scalar_lea.vmem [#allocation2], %s209
        // Predicated region
        $region33: #{cross_attention_pallas.7} parent=31 // pred_check
          %p211 = pneg %p54
        $region34: #{cross_attention_pallas.7} parent=31 // pred_check_branch
          %213 = sbr.rel (%p211) target = $region36
        $region35: #{cross_attention_pallas.7} parent=31 // pred_region
          %214 = dma.done %s207, 64
        $region36: #{cross_attention_pallas.7} parent=31 // pred_fallthru
          _
        // Predicated region
        $region37: #{cross_attention_pallas.7} parent=31 // pred_check
          %p215 = pneg %p80
        $region38: #{cross_attention_pallas.7} parent=31 // pred_check_branch
          %217 = sbr.rel (%p215) target = $region40
        $region39: #{cross_attention_pallas.7} parent=31 // pred_region
          %218 = dma.done [#allocation6], 256
        $region40: #{cross_attention_pallas.7} parent=31 // pred_fallthru
          _
        // Predicated region
        $region41: #{cross_attention_pallas.7} parent=31 // pred_check
          %p219 = pneg %p106
        $region42: #{cross_attention_pallas.7} parent=31 // pred_check_branch
          %221 = sbr.rel (%p219) target = $region44
        $region43: #{cross_attention_pallas.7} parent=31 // pred_region
          %222 = dma.done [#allocation6], 16
        $region44: #{cross_attention_pallas.7} parent=31 // pred_fallthru
          _
        %s223 = sand.u32 %s41, 1
        %s224 = scalar_lea.sflag [#allocation3], %s223
        %s225 = sand.u32 %s41, 1
        %s226 = smul.addr %s225, 4
        %s227 = scalar_lea.vmem [#allocation2], %s226
        %p228 = pneg %p54
        %p229 = pneg %p51
        %p230 = pneg %p80
        %p231 = pneg %p77
        %p232 = pneg %p106
        %p233 = pneg %p103
        %p234 = pneg %p134
        %p235 = pneg %p131
        %s236 = sand.u32 %s121, 1
        %s237 = scalar_lea.sflag [#allocation4], %s236
        %s238 = sand.u32 %s121, 1
        %s239 = smul.addr %s238, 8
        %s240 = scalar_lea.vmem [#allocation8], %s239
        %v242 = vld [vmem:[%s210] sm:$0xf]
        %v243 = vld [vmem:[#allocation5] sm:$0xf]
        %v244 = vld [vmem:[#allocation5 + $0x4] sm:$0xf]
        %v245 = vld [vmem:[#allocation5 + $0x8] sm:$0xf]
        %v246 = vld [vmem:[#allocation5 + $0xc] sm:$0xf]
        %v247 = vld [vmem:[#allocation7] sm:$0x1]
        %v249 = vlaneseq
        %v250 = vshrl.u32 %v249, 7
        %v251 = vsub.s32 0, %v250
        %v252 = vrot.slane %v247, %v251
        %v258 = vunpack.c.l.b16 %v243
        %v259 = vunpack.c.l.b16 %v244
        %v260 = vunpack.c.l.b16 %v245
        %v261 = vunpack.c.l.b16 %v246
        %v262 = vpack.c.b16 %v259, %v258
        %v263 = vpack.c.b16 %v261, %v260
        %vm266 = vcmask 261120
        %v268 = vsel %vm266, %v242, 0
        %270 = vmatprep.subr.bf16.mxu0 0
        %271 = vmatpush1.bf16.msra.mxu0 %v262
        %272 = vmatprep.subr.bf16.mxu0 0
        %273 = vmatpush1.bf16.msra.mxu0 %v263
        %274 = vmatprep.subr.bf16.mxu0 0
        %275 = vmatpush1.bf16.msra.mxu0 0
        %276 = vmatprep.subr.bf16.mxu0 0
        %277 = vmatpush1.bf16.msra.mxu0 0
        %278 = vmatprep.subr.bf16.mxu0 0
        %279 = vmatpush1.bf16.msra.mxu0 0
        %280 = vmatprep.subr.bf16.mxu0 0
        %281 = vmatpush1.bf16.msra.mxu0 0
        %282 = vmatprep.subr.bf16.mxu0 0
        %283 = vmatpush1.bf16.msra.mxu0 0
        %284 = vmatprep.subr.bf16.mxu0 0
        %285 = vmatpush1.bf16.msra.mxu0 0
        %286 = vmatprep.subr.bf16.mxu0 0
        %287 = vmatpush1.bf16.msra.mxu0 0
        %288 = vmatprep.subr.bf16.mxu0 0
        %289 = vmatpush1.bf16.msra.mxu0 0
        %290 = vmatprep.subr.bf16.mxu0 0
        %291 = vmatpush1.bf16.msra.mxu0 0
        %292 = vmatprep.subr.bf16.mxu0 0
        %293 = vmatpush1.bf16.msra.mxu0 0
        %294 = vmatprep.subr.bf16.mxu0 0
        %295 = vmatpush1.bf16.msra.mxu0 0
        %296 = vmatprep.subr.bf16.mxu0 0
        %297 = vmatpush1.bf16.msra.mxu0 0
        %298 = vmatprep.subr.bf16.mxu0 0
        %299 = vmatpush1.bf16.msra.mxu0 0
        %300 = vmatprep.subr.bf16.mxu0 0
        %301 = vmatpush1.bf16.msra.mxu0 0
        %302 = vmatprep.mubr.bf16.mxu0 0
        %303 = vmatmul.mubr.bf16.gmra.mrb[0].mxu0 %v268
        %v304 = vpop.f32.mrb[0].mxu0
        %v305 = vadd.f32 %v252, %v304
        %v306 = vpop.f32.mrb[0].mxu0
        %v307 = vpop.f32.mrb[0].mxu0
        %v308 = vpop.f32.mrb[0].mxu0
        %309 = vdwg.mxu0
        %vm310 = vcmask 130048
        %311 = vst.msk [vmem:[%s240] sm:$0xff] %vm310, %v305
        %s312 = sand.u32 %s121, 1
        %s313 = scalar_lea.sflag [#allocation4], %s312
        %s314 = sand.u32 %s121, 1
        %s315 = smul.addr %s314, 8
        %s316 = scalar_lea.vmem [#allocation8], %s315
        // Predicated region
        $region45: #{cross_attention_pallas.7} parent=31 // pred_check
          %p317 = pneg %p131
        $region46: #{cross_attention_pallas.7} parent=31 // pred_check_branch
          %319 = sbr.rel (%p317) target = $region48
        $region47: #{cross_attention_pallas.7} parent=31 // pred_region
          %s321 = ssub.s32 128, 128
          %322 = vsyncadd %s313, %s321
          %s323 = sadd.s32 %s25, %s26
          %s324 = smul.addr %s323, 128
          %s325 = scalar_lea.hbm %s3, %s324
          %s327 = sshll.u32 %s316, 4
          %s328 = int_to_ptr.vmem [resolvable:$true] %s327
          %330 = dma.vmem_to_hbm [thread:$0]  %s328, 128, %s325, %s313
        $region48: #{cross_attention_pallas.7} parent=31 // pred_fallthru
          _
      $region32: #{cross_attention_pallas.7} parent=5 // pred_fallthru
        _
      %p331 = scmp.le.s32.totalorder 2, %s16
      // Predicated region
      $region49: #{cross_attention_pallas.7} parent=5 // pred_check
        %p332 = pneg %p331
      $region50: #{cross_attention_pallas.7} parent=5 // pred_check_branch
        %334 = sbr.rel (%p332) target = $region52
      $region51: #{cross_attention_pallas.7} parent=5 // pred_region
        %s335 = ssub.s32 %s16, 2
        // Predicated region
        $region53: #{cross_attention_pallas.7} parent=51 // pred_check
          %p336 = pneg %p137
        $region54: #{cross_attention_pallas.7} parent=51 // pred_check_branch
          %338 = sbr.rel (%p336) target = $region56
        $region55: #{cross_attention_pallas.7} parent=51 // pred_region
          %s339 = sand.u32 %s122, 1
          %s340 = scalar_lea.sflag [#allocation4], %s339
          %s341 = sand.u32 %s122, 1
          %s342 = smul.addr %s341, 8
          %s343 = scalar_lea.vmem [#allocation8], %s342
          %344 = dma.done %s340, 128
        $region56: #{cross_attention_pallas.7} parent=51 // pred_fallthru
          _
      $region52: #{cross_attention_pallas.7} parent=5 // pred_fallthru
        _
    $region6: #{cross_attention_pallas.7} parent=1 // loop_footer
      %s20 = sadd.s32 1, %s16
    $region7: #{cross_attention_pallas.7} parent=1 // loop_footer_branch
      %15 = sbr.rel target = $region3
    $region8: #{cross_attention_pallas.7} parent=1 // loop_exit
      _
    %345 = vsyncpa [#allocation3], 1
    %s346 = scalar_lea.sflag [#allocation3], 1
    %347 = vsyncpa %s346, 1
    %348 = vsyncpa [#allocation6], 1
    %349 = vsyncpa [#allocation4], 1
    %s350 = scalar_lea.sflag [#allocation4], 1
    %351 = vsyncpa %s350, 1

</llo_original>
